<compile_context>
chip_gen: v6e
topology: v6e:2x2x1
jax: 0.10.0
libtpu: 0.0.40
codegen_flags: <defaults>
</compile_context>

<pallas_src>
import functools
import math

import jax
import jax.numpy as jnp
from jax.experimental import pallas as pl
from jax.experimental.pallas import tpu as pltpu


_EPS = 1e-5  # torch.nn.LayerNorm default


# ---------------------------------------------------------------------------
# Hardware-dependent configuration (computed once at import)
# ---------------------------------------------------------------------------

def _device_config():
    """Row tiles / scoped-VMEM budget per TPU generation."""
    try:
        vmem_cap = int(pltpu.get_tpu_info().vmem_capacity_bytes)
    except Exception:
        vmem_cap = 64 * 1024 * 1024  # conservative (v7x-sized) default
    big_vmem = vmem_cap >= 96 * 1024 * 1024  # v5e / v6e have 128 MiB, v7x 64 MiB
    return {
        "row_tile": 512 if big_vmem else 256,   # linear / proj+LN kernels
        "ffn_tile": 256,                        # FFN holds (TM, d_ff) hidden
        "vmem_limit": (96 if big_vmem else 44) * 1024 * 1024,
    }


_CFG = _device_config()


def _probe_buffered_one():
    """Return pl.Buffered(1) if single-buffering grid-invariant blocks is
    supported by this Pallas version, else None (keep default buffering)."""
    try:
        mode = pl.Buffered(buffer_count=1)

        def _copy(x_ref, o_ref):
            o_ref[...] = x_ref[...] * 2.0

        x = jnp.ones((8, 128), jnp.float32)
        fn = pl.pallas_call(
            _copy,
            out_shape=jax.ShapeDtypeStruct((8, 128), jnp.float32),
            grid=(2,),
            in_specs=[pl.BlockSpec((8, 128), lambda i: (0, 0),
                                   pipeline_mode=mode)],
            out_specs=pl.BlockSpec((8, 128), lambda i: (0, 0)),
        )
        jax.block_until_ready(fn(x))
        return mode
    except Exception:
        return None


_CONST_MODE = _probe_buffered_one()


def _compiler_params(n_axes=1):
    return pltpu.CompilerParams(
        dimension_semantics=("parallel",) * n_axes,
        vmem_limit_bytes=_CFG["vmem_limit"],
    )


def _const_spec(block_shape):
    """BlockSpec for a grid-invariant (weight-like) operand."""
    nd = len(block_shape)
    idx = lambda i, _nd=nd: (0,) * _nd
    if _CONST_MODE is not None:
        return pl.BlockSpec(block_shape, idx, pipeline_mode=_CONST_MODE)
    return pl.BlockSpec(block_shape, idx)


def _row_tile(m, target):
    # Full array when small, otherwise a multiple-of-8 row tile that pipelines
    # HBM<->VMEM DMA against the MXU.
    return m if m <= target else target


# ---------------------------------------------------------------------------
# Pallas kernels
# ---------------------------------------------------------------------------

def _matmul_bias_kernel(x_ref, w_ref, b_ref, o_ref):
    # (TM, K) @ (K, N) + (1, N); bf16 MXU operands, f32 accumulation.
    x = x_ref[...].astype(jnp.bfloat16)
    y = jnp.dot(x, w_ref[...], preferred_element_type=jnp.float32)
    o_ref[...] = (y + b_ref[...]).astype(o_ref.dtype)


def linear(x, w_bf16, b, out_dtype=None):
    """x: (M, K) f32, w_bf16: (K, N) bf16, b: (N,) f32 -> (M, N)."""
    M, K = x.shape
    N = w_bf16.shape[1]
    TM = _row_tile(M, _CFG["row_tile"])
    out_dtype = x.dtype if out_dtype is None else out_dtype
    return pl.pallas_call(
        _matmul_bias_kernel,
        out_shape=jax.ShapeDtypeStruct((M, N), out_dtype),
        grid=(pl.cdiv(M, TM),),
        in_specs=[
            pl.BlockSpec((TM, K), lambda i: (i, 0)),  # activation row tile
            _const_spec((K, N)),                      # weight resident
            _const_spec((1, N)),                      # bias
        ],
        out_specs=pl.BlockSpec((TM, N), lambda i: (i, 0)),
        compiler_params=_compiler_params(),
    )(x, w_bf16, b.reshape(1, N))


def _attention_kernel(qkv_ref, o_ref, *, h):
    # One batch row-range per grid step; all h heads handled here so the output
    # store is one lane-dense (S, D) block. 1/sqrt(Dh) is pre-folded into Wq.
    qkv = qkv_ref[0]                 # (S, 3D) bf16
    three_d = qkv.shape[-1]
    D = three_d // 3
    Dh = D // h
    heads = []
    for i in range(h):               # static unroll; G = h heads per grid step
        q = qkv[:, i * Dh:(i + 1) * Dh]
        k = qkv[:, D + i * Dh:D + (i + 1) * Dh]
        v = qkv[:, 2 * D + i * Dh:2 * D + (i + 1) * Dh]
        s = jax.lax.dot_general(q, k, (((1,), (1,)), ((), ())),
                                preferred_element_type=jnp.float32)  # (S, S)
        m = jnp.max(s, axis=-1, keepdims=True)
        p = jnp.exp(s - m)
        denom = jnp.sum(p, axis=-1, keepdims=True)
        p = p * pl.reciprocal(denom, approx=True)
        heads.append(jnp.dot(p.astype(jnp.bfloat16), v,
                             preferred_element_type=jnp.float32))    # (S, Dh)
    o_ref[0, :, :] = jnp.concatenate(heads, axis=-1).astype(o_ref.dtype)


def attention(qkv3, h):
    """qkv3: (B, S, 3D) bf16 -> context (B, S, D) bf16, gridded over B."""
    B, S, three_d = qkv3.shape
    D = three_d // 3
    return pl.pallas_call(
        functools.partial(_attention_kernel, h=h),
        out_shape=jax.ShapeDtypeStruct((B, S, D), jnp.bfloat16),
        grid=(B,),
        in_specs=[pl.BlockSpec((1, S, three_d), lambda b: (b, 0, 0))],
        out_specs=pl.BlockSpec((1, S, D), lambda b: (b, 0, 0)),
        compiler_params=_compiler_params(),
    )(qkv3)
    # TODO(synk): for very long sequences (S >= ~2048) add flash-style Sq/Sk
    # tiling with running max/sum scratch to bound the (S, S) score tile.


def _proj_add_ln_kernel(a_ref, res_ref, w_ref, b_ref, g_ref, beta_ref, o_ref,
                        *, eps):
    # Fused: LayerNorm(residual + (attn @ Wo + bo)); attn arrives in bf16.
    y = jnp.dot(a_ref[...], w_ref[...],
                preferred_element_type=jnp.float32) + b_ref[...]
    z = res_ref[...] + y
    mean = jnp.mean(z, axis=-1, keepdims=True)
    var = jnp.mean(jnp.square(z - mean), axis=-1, keepdims=True)
    zn = (z - mean) * jax.lax.rsqrt(var + eps)
    o_ref[...] = (zn * g_ref[...] + beta_ref[...]).astype(o_ref.dtype)


def proj_add_layernorm(attn_bf16, residual, w_bf16, b, gamma, beta, eps=_EPS):
    M, K = attn_bf16.shape
    N = w_bf16.shape[1]
    TM = _row_tile(M, _CFG["row_tile"])
    return pl.pallas_call(
        functools.partial(_proj_add_ln_kernel, eps=eps),
        out_shape=jax.ShapeDtypeStruct((M, N), residual.dtype),
        grid=(pl.cdiv(M, TM),),
        in_specs=[
            pl.BlockSpec((TM, K), lambda i: (i, 0)),
            pl.BlockSpec((TM, N), lambda i: (i, 0)),
            _const_spec((K, N)),
            _const_spec((1, N)),
            _const_spec((1, N)),
            _const_spec((1, N)),
        ],
        out_specs=pl.BlockSpec((TM, N), lambda i: (i, 0)),
        compiler_params=_compiler_params(),
    )(attn_bf16, residual, w_bf16, b.reshape(1, N), gamma.reshape(1, N),
      beta.reshape(1, N))


def _ffn_add_ln_kernel(x_ref, w1_ref, b1_ref, w2_ref, b2_ref, g_ref, beta_ref,
                       o_ref, *, eps):
    # Fused: LayerNorm(x + relu(x @ W1 + b1) @ W2 + b2)
    x = x_ref[...]
    hid = jnp.dot(x.astype(jnp.bfloat16), w1_ref[...],
                  preferred_element_type=jnp.float32)
    hid = jnp.maximum(hid + b1_ref[...], 0.0)
    y = jnp.dot(hid.astype(jnp.bfloat16), w2_ref[...],
                preferred_element_type=jnp.float32) + b2_ref[...]
    z = x + y
    mean = jnp.mean(z, axis=-1, keepdims=True)
    var = jnp.mean(jnp.square(z - mean), axis=-1, keepdims=True)
    zn = (z - mean) * jax.lax.rsqrt(var + eps)
    o_ref[...] = (zn * g_ref[...] + beta_ref[...]).astype(o_ref.dtype)


def ffn_add_layernorm(x, w1_bf16, b1, w2_bf16, b2, gamma, beta, eps=_EPS):
    M, D = x.shape
    d_ff = w1_bf16.shape[1]
    TM = _row_tile(M, _CFG["ffn_tile"])
    return pl.pallas_call(
        functools.partial(_ffn_add_ln_kernel, eps=eps),
        out_shape=jax.ShapeDtypeStruct((M, D), x.dtype),
        grid=(pl.cdiv(M, TM),),
        in_specs=[
            pl.BlockSpec((TM, D), lambda i: (i, 0)),
            _const_spec((D, d_ff)),
            _const_spec((1, d_ff)),
            _const_spec((d_ff, D)),
            _const_spec((1, D)),
            _const_spec((1, D)),
            _const_spec((1, D)),
        ],
        out_specs=pl.BlockSpec((TM, D), lambda i: (i, 0)),
        compiler_params=_compiler_params(),
    )(x, w1_bf16, b1.reshape(1, d_ff), w2_bf16, b2.reshape(1, D),
      gamma.reshape(1, D), beta.reshape(1, D))


# ---------------------------------------------------------------------------
# Model (parameter init + one-time prep + forward glue around the kernels)
# ---------------------------------------------------------------------------

def init_params(key, vocab_size, d_model, seq_len, n_layers, h, d_ff):
    keys = jax.random.split(key, 2 + n_layers)

    def dense(k, fan_in, fan_out):
        kw, _ = jax.random.split(k)
        w = jax.random.normal(kw, (fan_in, fan_out), jnp.float32) * 0.02
        b = jnp.zeros((fan_out,), jnp.float32)
        return w, b

    params = {
        "tok_emb": jax.random.normal(keys[0], (vocab_size, d_model),
                                     jnp.float32) * 0.02,
        "pos_emb": jax.random.normal(keys[1], (seq_len, d_model),
                                     jnp.float32) * 0.02,
        "layers": [],
    }
    for li in range(n_layers):
        lk = jax.random.split(keys[2 + li], 6)
        wq, bq = dense(lk[0], d_model, d_model)
        wk, bk = dense(lk[1], d_model, d_model)
        wv, bv = dense(lk[2], d_model, d_model)
        wo, bo = dense(lk[3], d_model, d_model)
        w1, b1 = dense(lk[4], d_model, d_ff)
        w2, b2 = dense(lk[5], d_ff, d_model)
        params["layers"].append({
            "wq": wq, "bq": bq, "wk": wk, "bk": bk, "wv": wv, "bv": bv,
            "wo": wo, "bo": bo,
            "ln1_g": jnp.ones((d_model,), jnp.float32),
            "ln1_b": jnp.zeros((d_model,), jnp.float32),
            "w1": w1, "b1": b1, "w2": w2, "b2": b2,
            "ln2_g": jnp.ones((d_model,), jnp.float32),
            "ln2_b": jnp.zeros((d_model,), jnp.float32),
        })
    return params


def prepare_params(params, h):
    """One-time inference prep: fuse Q|K|V, fold 1/sqrt(Dh) into Wq/bq, and
    cast matmul weights to bf16 (done ONCE, not per forward)."""
    d_model = params["tok_emb"].shape[1]
    scale = 1.0 / math.sqrt(d_model // h)
    layers = []
    for p in params["layers"]:
        layers.append({
            "wqkv": jnp.concatenate([p["wq"] * scale, p["wk"], p["wv"]],
                                    axis=1).astype(jnp.bfloat16),
            "bqkv": jnp.concatenate([p["bq"] * scale, p["bk"], p["bv"]],
                                    axis=0),
            "wo": p["wo"].astype(jnp.bfloat16), "bo": p["bo"],
            "w1": p["w1"].astype(jnp.bfloat16), "b1": p["b1"],
            "w2": p["w2"].astype(jnp.bfloat16), "b2": p["b2"],
            "ln1_g": p["ln1_g"], "ln1_b": p["ln1_b"],
            "ln2_g": p["ln2_g"], "ln2_b": p["ln2_b"],
        })
    return {"tok_emb": params["tok_emb"], "pos_emb": params["pos_emb"],
            "layers": layers}


def multi_head_attention(x2d, B, S, h, wp):
    """x2d: (B*S, D) f32 -> (B*S, D) bf16 attention context (pre Wo)."""
    D = x2d.shape[-1]
    # Fused Q|K|V projection: one (D, 3D) matmul, bf16 output.
    qkv = linear(x2d, wp["wqkv"], wp["bqkv"], out_dtype=jnp.bfloat16)
    # Leading-dim reshape only (free); attention slices heads inside the
    # kernel and writes the context directly in (B, S, D) layout -> no XLA
    # transposes around attention.
    qkv3 = qkv.reshape(B, S, 3 * D)
    ctx = attention(qkv3, h)                     # (B, S, D) bf16
    return ctx.reshape(B * S, D)


def encoder_layer(x2d, B, S, h, wp):
    attn = multi_head_attention(x2d, B, S, h, wp)
    # Output projection fused with Add & LayerNorm.
    x2d = proj_add_layernorm(attn, x2d, wp["wo"], wp["bo"],
                             wp["ln1_g"], wp["ln1_b"])
    # FFN (matmul + ReLU + matmul) fused with Add & LayerNorm.
    x2d = ffn_add_layernorm(x2d, wp["w1"], wp["b1"], wp["w2"], wp["b2"],
                            wp["ln2_g"], wp["ln2_b"])
    return x2d


def bert_forward(prepared, tokens, h):
    """tokens: (B, S) int32 -> (B, S, D) float32."""
    B, S = tokens.shape
    D = prepared["tok_emb"].shape[1]
    # Embedding lookup (gather) + positional embedding: glue in plain JAX.
    # TODO(synk): dropout layers omitted (eval-mode identity); no padding mask;
    # only attention_type='full' implemented (no clustered attention).
    emb = jnp.take(prepared["tok_emb"], tokens, axis=0)        # (B, S, D)
    emb = emb + prepared["pos_emb"][None, :S, :]               # (B, S, D)
    x2d = emb.reshape(B * S, D).astype(jnp.float32)
    for wp in prepared["layers"]:
        x2d = encoder_layer(x2d, B, S, h, wp)
    return x2d.reshape(B, S, D)


# ---------------------------------------------------------------------------

if __name__ == "__main__":
    vocab_size = 100
    d_model = 32
    seq_len = 8
    n_layers = 2
    h = 4
    d_ff = 64
    batch = 2

    key = jax.random.PRNGKey(0)
    pkey, xkey = jax.random.split(key)
    params = init_params(pkey, vocab_size, d_model, seq_len, n_layers, h, d_ff)
    prepared = prepare_params(params, h)   # one-time bf16/fused weight prep
    tokens = jax.random.randint(xkey, (batch, seq_len), 0, vocab_size,
                                dtype=jnp.int32)

    out = jax.jit(functools.partial(bert_forward, h=h))(prepared, tokens)
    out = jax.block_until_ready(out)
    assert out.shape == (batch, seq_len, d_model)
    assert bool(jnp.all(jnp.isfinite(out)))
    print("KERNEL_OK")
</pallas_src>

<mosaic_0001>
module attributes {stable_mosaic.version = 11 : i64} {
  func.func @_copy(%arg0: i32, %arg1: memref<8x128xf32, #tpu.memory_space<vmem>>, %arg2: memref<8x128xf32, #tpu.memory_space<vmem>>) attributes {dimension_semantics = [#tpu.dimension_semantics<arbitrary>], iteration_bounds = array<i64: 2>, scalar_prefetch = 0 : i64, scratch_operands = 0 : i64, tpu.core_type = #tpu.core_type<tc>, window_params = [{pipeline_mode = #tpu.pipeline_mode<synchronous>, transform_indices = @transform_0, window_bounds = array<i64: 8, 128>}, {pipeline_mode = #tpu.pipeline_mode<synchronous>, transform_indices = @transform_1, window_bounds = array<i64: 8, 128>}]} {
    %c0 = arith.constant 0 : index
    %c0_0 = arith.constant 0 : index
    %0 = vector.load %arg1[%c0, %c0_0] : memref<8x128xf32, #tpu.memory_space<vmem>>, vector<8x128xf32>
    %cst = arith.constant 2.000000e+00 : f32
    %1 = vector.broadcast %cst : f32 to vector<8x128xf32>
    %2 = arith.mulf %0, %1 : vector<8x128xf32>
    %c0_1 = arith.constant 0 : index
    %c0_2 = arith.constant 0 : index
    %3 = vector.load %arg2[%c0_1, %c0_2] : memref<8x128xf32, #tpu.memory_space<vmem>>, vector<8x128xf32>
    tpu.vector_store %arg2[%c0_1, %c0_2], %2 {strides = array<i32>} : memref<8x128xf32, #tpu.memory_space<vmem>>, vector<8x128xf32>,
    return
  }
  func.func @transform_0(%arg0: i32) -> (i32, i32) {
    %c0_i32 = arith.constant 0 : i32
    %c0_i32_0 = arith.constant 0 : i32
    %c0_i32_1 = arith.constant 0 : i32
    return %c0_i32, %c0_i32_0 : i32, i32
  }
  func.func @transform_1(%arg0: i32) -> (i32, i32) {
    %c0_i32 = arith.constant 0 : i32
    %c0_i32_0 = arith.constant 0 : i32
    %c0_i32_1 = arith.constant 0 : i32
    return %c0_i32, %c0_i32_0 : i32, i32
  }
}

module attributes {stable_mosaic.version = 11 : i64} {
  func.func @_ffn_add_ln_kernel(%arg0: i32, %arg1: memref<16x32xf32, #tpu.memory_space<vmem>>, %arg2: memref<32x64xbf16, #tpu.memory_space<vmem>>, %arg3: memref<1x64xf32, #tpu.memory_space<vmem>>, %arg4: memref<64x32xbf16, #tpu.memory_space<vmem>>, %arg5: memref<1x32xf32, #tpu.memory_space<vmem>>, %arg6: memref<1x32xf32, #tpu.memory_space<vmem>>, %arg7: memref<1x32xf32, #tpu.memory_space<vmem>>, %arg8: memref<16x32xf32, #tpu.memory_space<vmem>>) attributes {dimension_semantics = [#tpu.dimension_semantics<parallel>], iteration_bounds = array<i64: 1>, scalar_prefetch = 0 : i64, scratch_operands = 0 : i64, tpu.core_type = #tpu.core_type<tc>, window_params = [{transform_indices = @transform_0, window_bounds = array<i64: 16, 32>}, {pipeline_mode = #tpu.pipeline_mode<synchronous>, transform_indices = @transform_1, window_bounds = array<i64: 32, 64>}, {pipeline_mode = #tpu.pipeline_mode<synchronous>, transform_indices = @transform_2, window_bounds = array<i64: 1, 64>}, {pipeline_mode = #tpu.pipeline_mode<synchronous>, transform_indices = @transform_3, window_bounds = array<i64: 64, 32>}, {pipeline_mode = #tpu.pipeline_mode<synchronous>, transform_indices = @transform_4, window_bounds = array<i64: 1, 32>}, {pipeline_mode = #tpu.pipeline_mode<synchronous>, transform_indices = @transform_5, window_bounds = array<i64: 1, 32>}, {pipeline_mode = #tpu.pipeline_mode<synchronous>, transform_indices = @transform_6, window_bounds = array<i64: 1, 32>}, {transform_indices = @transform_7, window_bounds = array<i64: 16, 32>}]} {
    %c0 = arith.constant 0 : index
    %c0_0 = arith.constant 0 : index
    %0 = vector.load %arg1[%c0, %c0_0] : memref<16x32xf32, #tpu.memory_space<vmem>>, vector<16x32xf32>
    %1 = arith.truncf %0 : vector<16x32xf32> to vector<16x32xbf16>
    %c0_1 = arith.constant 0 : index
    %c0_2 = arith.constant 0 : index
    %2 = vector.load %arg2[%c0_1, %c0_2] : memref<32x64xbf16, #tpu.memory_space<vmem>>, vector<32x64xbf16>
    %cst = arith.constant dense<0.000000e+00> : vector<16x64xf32>
    %3 = tpu.matmul %1, %2, %cst {dimension_numbers = #tpu.dot_dimension_numbers<[1], [0], [0], [1], [0, 0, 1, 1], [], []>} : vector<16x32xbf16>, vector<32x64xbf16>, vector<16x64xf32> -> vector<16x64xf32>
    %c0_3 = arith.constant 0 : index
    %c0_4 = arith.constant 0 : index
    %4 = vector.load %arg3[%c0_3, %c0_4] : memref<1x64xf32, #tpu.memory_space<vmem>>, vector<1x64xf32>
    %5 = vector.broadcast %4 : vector<1x64xf32> to vector<16x64xf32>
    %6 = arith.addf %3, %5 : vector<16x64xf32>
    %cst_5 = arith.constant 0.000000e+00 : f32
    %7 = vector.broadcast %cst_5 : f32 to vector<16x64xf32>
    %8 = arith.maximumf %6, %7 : vector<16x64xf32>
    %9 = arith.truncf %8 : vector<16x64xf32> to vector<16x64xbf16>
    %c0_6 = arith.constant 0 : index
    %c0_7 = arith.constant 0 : index
    %10 = vector.load %arg4[%c0_6, %c0_7] : memref<64x32xbf16, #tpu.memory_space<vmem>>, vector<64x32xbf16>
    %cst_8 = arith.constant dense<0.000000e+00> : vector<16x32xf32>
    %11 = tpu.matmul %9, %10, %cst_8 {dimension_numbers = #tpu.dot_dimension_numbers<[1], [0], [0], [1], [0, 0, 1, 1], [], []>} : vector<16x64xbf16>, vector<64x32xbf16>, vector<16x32xf32> -> vector<16x32xf32>
    %c0_9 = arith.constant 0 : index
    %c0_10 = arith.constant 0 : index
    %12 = vector.load %arg5[%c0_9, %c0_10] : memref<1x32xf32, #tpu.memory_space<vmem>>, vector<1x32xf32>
    %13 = vector.broadcast %12 : vector<1x32xf32> to vector<16x32xf32>
    %14 = arith.addf %11, %13 : vector<16x32xf32>
    %15 = arith.addf %0, %14 : vector<16x32xf32>
    %cst_11 = arith.constant dense<0.000000e+00> : vector<16xf32>
    %16 = vector.multi_reduction <add>, %15, %cst_11 [1] : vector<16x32xf32> to vector<16xf32>
    %17 = vector.shape_cast %16 : vector<16xf32> to vector<16x1xf32>
    %cst_12 = arith.constant 3.200000e+01 : f32
    %18 = vector.broadcast %cst_12 : f32 to vector<16x1xf32>
    %19 = arith.divf %17, %18 : vector<16x1xf32>
    %20 = vector.broadcast %19 : vector<16x1xf32> to vector<16x32xf32>
    %21 = arith.subf %15, %20 : vector<16x32xf32>
    %22 = arith.mulf %21, %21 : vector<16x32xf32>
    %cst_13 = arith.constant dense<0.000000e+00> : vector<16xf32>
    %23 = vector.multi_reduction <add>, %22, %cst_13 [1] : vector<16x32xf32> to vector<16xf32>
    %24 = vector.shape_cast %23 : vector<16xf32> to vector<16x1xf32>
    %cst_14 = arith.constant 3.200000e+01 : f32
    %25 = vector.broadcast %cst_14 : f32 to vector<16x1xf32>
    %26 = arith.divf %24, %25 : vector<16x1xf32>
    %27 = vector.broadcast %19 : vector<16x1xf32> to vector<16x32xf32>
    %28 = arith.subf %15, %27 : vector<16x32xf32>
    %cst_15 = arith.constant 9.99999974E-6 : f32
    %29 = vector.broadcast %cst_15 : f32 to vector<16x1xf32>
    %30 = arith.addf %26, %29 : vector<16x1xf32>
    %31 = math.rsqrt %30 : vector<16x1xf32>
    %32 = vector.broadcast %31 : vector<16x1xf32> to vector<16x32xf32>
    %33 = arith.mulf %28, %32 : vector<16x32xf32>
    %c0_16 = arith.constant 0 : index
    %c0_17 = arith.constant 0 : index
    %34 = vector.load %arg6[%c0_16, %c0_17] : memref<1x32xf32, #tpu.memory_space<vmem>>, vector<1x32xf32>
    %35 = vector.broadcast %34 : vector<1x32xf32> to vector<16x32xf32>
    %36 = arith.mulf %33, %35 : vector<16x32xf32>
    %c0_18 = arith.constant 0 : index
    %c0_19 = arith.constant 0 : index
    %37 = vector.load %arg7[%c0_18, %c0_19] : memref<1x32xf32, #tpu.memory_space<vmem>>, vector<1x32xf32>
    %38 = vector.broadcast %37 : vector<1x32xf32> to vector<16x32xf32>
    %39 = arith.addf %36, %38 : vector<16x32xf32>
    %c0_20 = arith.constant 0 : index
    %c0_21 = arith.constant 0 : index
    %40 = vector.load %arg8[%c0_20, %c0_21] : memref<16x32xf32, #tpu.memory_space<vmem>>, vector<16x32xf32>
    tpu.vector_store %arg8[%c0_20, %c0_21], %39 {strides = array<i32>} : memref<16x32xf32, #tpu.memory_space<vmem>>, vector<16x32xf32>,
    return
  }
  func.func @transform_0(%arg0: i32) -> (i32, i32) {
    %c0_i32 = arith.constant 0 : i32
    %c0_i32_0 = arith.constant 0 : i32
    return %arg0, %c0_i32 : i32, i32
  }
  func.func @transform_1(%arg0: i32) -> (i32, i32) {
    %c0_i32 = arith.constant 0 : i32
    %c0_i32_0 = arith.constant 0 : i32
    %c0_i32_1 = arith.constant 0 : i32
    return %c0_i32, %c0_i32_0 : i32, i32
  }
  func.func @transform_2(%arg0: i32) -> (i32, i32) {
    %c0_i32 = arith.constant 0 : i32
    %c0_i32_0 = arith.constant 0 : i32
    %c0_i32_1 = arith.constant 0 : i32
    return %c0_i32, %c0_i32_0 : i32, i32
  }
  func.func @transform_3(%arg0: i32) -> (i32, i32) {
    %c0_i32 = arith.constant 0 : i32
    %c0_i32_0 = arith.constant 0 : i32
    %c0_i32_1 = arith.constant 0 : i32
    return %c0_i32, %c0_i32_0 : i32, i32
  }
  func.func @transform_4(%arg0: i32) -> (i32, i32) {
    %c0_i32 = arith.constant 0 : i32
    %c0_i32_0 = arith.constant 0 : i32
    %c0_i32_1 = arith.constant 0 : i32
    return %c0_i32, %c0_i32_0 : i32, i32
  }
  func.func @transform_5(%arg0: i32) -> (i32, i32) {
    %c0_i32 = arith.constant 0 : i32
    %c0_i32_0 = arith.constant 0 : i32
    %c0_i32_1 = arith.constant 0 : i32
    return %c0_i32, %c0_i32_0 : i32, i32
  }
  func.func @transform_6(%arg0: i32) -> (i32, i32) {
    %c0_i32 = arith.constant 0 : i32
    %c0_i32_0 = arith.constant 0 : i32
    %c0_i32_1 = arith.constant 0 : i32
    return %c0_i32, %c0_i32_0 : i32, i32
  }
  func.func @transform_7(%arg0: i32) -> (i32, i32) {
    %c0_i32 = arith.constant 0 : i32
    %c0_i32_0 = arith.constant 0 : i32
    return %arg0, %c0_i32 : i32, i32
  }
}

module attributes {stable_mosaic.version = 11 : i64} {
  func.func @_attention_kernel(%arg0: i32, %arg1: memref<1x8x96xbf16, #tpu.memory_space<vmem>>, %arg2: memref<1x8x32xbf16, #tpu.memory_space<vmem>>) attributes {dimension_semantics = [#tpu.dimension_semantics<parallel>], iteration_bounds = array<i64: 2>, scalar_prefetch = 0 : i64, scratch_operands = 0 : i64, tpu.core_type = #tpu.core_type<tc>, window_params = [{transform_indices = @transform_0, window_bounds = array<i64: 1, 8, 96>}, {transform_indices = @transform_1, window_bounds = array<i64: 1, 8, 32>}]} {
    %c0 = arith.constant 0 : index
    %c0_0 = arith.constant 0 : index
    %c0_1 = arith.constant 0 : index
    %0 = vector.load %arg1[%c0, %c0_0, %c0_1] : memref<1x8x96xbf16, #tpu.memory_space<vmem>>, vector<1x8x96xbf16>
    %1 = vector.shape_cast %0 : vector<1x8x96xbf16> to vector<8x96xbf16>
    %2 = vector.extract_strided_slice %1 {offsets = [0, 0], sizes = [8, 8], strides = [1, 1]} : vector<8x96xbf16> to vector<8x8xbf16>
    %3 = vector.extract_strided_slice %1 {offsets = [0, 32], sizes = [8, 8], strides = [1, 1]} : vector<8x96xbf16> to vector<8x8xbf16>
    %4 = vector.extract_strided_slice %1 {offsets = [0, 64], sizes = [8, 8], strides = [1, 1]} : vector<8x96xbf16> to vector<8x8xbf16>
    %cst = arith.constant dense<0.000000e+00> : vector<8x8xf32>
    %5 = tpu.matmul %2, %3, %cst {dimension_numbers = #tpu.dot_dimension_numbers<[1], [1], [0], [0], [0, 0, 1, 0], [], []>} : vector<8x8xbf16>, vector<8x8xbf16>, vector<8x8xf32> -> vector<8x8xf32>
    %cst_2 = arith.constant dense<0xFF800000> : vector<8xf32>
    %6 = vector.multi_reduction <maximumf>, %5, %cst_2 [1] : vector<8x8xf32> to vector<8xf32>
    %7 = vector.shape_cast %6 : vector<8xf32> to vector<8x1xf32>
    %8 = vector.broadcast %7 : vector<8x1xf32> to vector<8x8xf32>
    %9 = arith.subf %5, %8 : vector<8x8xf32>
    %10 = math.exp %9 : vector<8x8xf32>
    %cst_3 = arith.constant dense<0.000000e+00> : vector<8xf32>
    %11 = vector.multi_reduction <add>, %10, %cst_3 [1] : vector<8x8xf32> to vector<8xf32>
    %12 = vector.shape_cast %11 : vector<8xf32> to vector<8x1xf32>
    %13 = tpu.reciprocal %12 {approx = true} : vector<8x1xf32> -> vector<8x1xf32>
    %14 = vector.broadcast %13 : vector<8x1xf32> to vector<8x8xf32>
    %15 = arith.mulf %10, %14 : vector<8x8xf32>
    %16 = arith.truncf %15 : vector<8x8xf32> to vector<8x8xbf16>
    %cst_4 = arith.constant dense<0.000000e+00> : vector<8x8xf32>
    %17 = tpu.matmul %16, %4, %cst_4 {dimension_numbers = #tpu.dot_dimension_numbers<[1], [0], [0], [1], [0, 0, 1, 1], [], []>} : vector<8x8xbf16>, vector<8x8xbf16>, vector<8x8xf32> -> vector<8x8xf32>
    %18 = vector.extract_strided_slice %1 {offsets = [0, 8], sizes = [8, 8], strides = [1, 1]} : vector<8x96xbf16> to vector<8x8xbf16>
    %19 = vector.extract_strided_slice %1 {offsets = [0, 40], sizes = [8, 8], strides = [1, 1]} : vector<8x96xbf16> to vector<8x8xbf16>
    %20 = vector.extract_strided_slice %1 {offsets = [0, 72], sizes = [8, 8], strides = [1, 1]} : vector<8x96xbf16> to vector<8x8xbf16>
    %cst_5 = arith.constant dense<0.000000e+00> : vector<8x8xf32>
    %21 = tpu.matmul %18, %19, %cst_5 {dimension_numbers = #tpu.dot_dimension_numbers<[1], [1], [0], [0], [0, 0, 1, 0], [], []>} : vector<8x8xbf16>, vector<8x8xbf16>, vector<8x8xf32> -> vector<8x8xf32>
    %cst_6 = arith.constant dense<0xFF800000> : vector<8xf32>
    %22 = vector.multi_reduction <maximumf>, %21, %cst_6 [1] : vector<8x8xf32> to vector<8xf32>
    %23 = vector.shape_cast %22 : vector<8xf32> to vector<8x1xf32>
    %24 = vector.broadcast %23 : vector<8x1xf32> to vector<8x8xf32>
    %25 = arith.subf %21, %24 : vector<8x8xf32>
    %26 = math.exp %25 : vector<8x8xf32>
    %cst_7 = arith.constant dense<0.000000e+00> : vector<8xf32>
    %27 = vector.multi_reduction <add>, %26, %cst_7 [1] : vector<8x8xf32> to vector<8xf32>
    %28 = vector.shape_cast %27 : vector<8xf32> to vector<8x1xf32>
    %29 = tpu.reciprocal %28 {approx = true} : vector<8x1xf32> -> vector<8x1xf32>
    %30 = vector.broadcast %29 : vector<8x1xf32> to vector<8x8xf32>
    %31 = arith.mulf %26, %30 : vector<8x8xf32>
    %32 = arith.truncf %31 : vector<8x8xf32> to vector<8x8xbf16>
    %cst_8 = arith.constant dense<0.000000e+00> : vector<8x8xf32>
    %33 = tpu.matmul %32, %20, %cst_8 {dimension_numbers = #tpu.dot_dimension_numbers<[1], [0], [0], [1], [0, 0, 1, 1], [], []>} : vector<8x8xbf16>, vector<8x8xbf16>, vector<8x8xf32> -> vector<8x8xf32>
    %34 = vector.extract_strided_slice %1 {offsets = [0, 16], sizes = [8, 8], strides = [1, 1]} : vector<8x96xbf16> to vector<8x8xbf16>
    %35 = vector.extract_strided_slice %1 {offsets = [0, 48], sizes = [8, 8], strides = [1, 1]} : vector<8x96xbf16> to vector<8x8xbf16>
    %36 = vector.extract_strided_slice %1 {offsets = [0, 80], sizes = [8, 8], strides = [1, 1]} : vector<8x96xbf16> to vector<8x8xbf16>
    %cst_9 = arith.constant dense<0.000000e+00> : vector<8x8xf32>
    %37 = tpu.matmul %34, %35, %cst_9 {dimension_numbers = #tpu.dot_dimension_numbers<[1], [1], [0], [0], [0, 0, 1, 0], [], []>} : vector<8x8xbf16>, vector<8x8xbf16>, vector<8x8xf32> -> vector<8x8xf32>
    %cst_10 = arith.constant dense<0xFF800000> : vector<8xf32>
    %38 = vector.multi_reduction <maximumf>, %37, %cst_10 [1] : vector<8x8xf32> to vector<8xf32>
    %39 = vector.shape_cast %38 : vector<8xf32> to vector<8x1xf32>
    %40 = vector.broadcast %39 : vector<8x1xf32> to vector<8x8xf32>
    %41 = arith.subf %37, %40 : vector<8x8xf32>
    %42 = math.exp %41 : vector<8x8xf32>
    %cst_11 = arith.constant dense<0.000000e+00> : vector<8xf32>
    %43 = vector.multi_reduction <add>, %42, %cst_11 [1] : vector<8x8xf32> to vector<8xf32>
    %44 = vector.shape_cast %43 : vector<8xf32> to vector<8x1xf32>
    %45 = tpu.reciprocal %44 {approx = true} : vector<8x1xf32> -> vector<8x1xf32>
    %46 = vector.broadcast %45 : vector<8x1xf32> to vector<8x8xf32>
    %47 = arith.mulf %42, %46 : vector<8x8xf32>
    %48 = arith.truncf %47 : vector<8x8xf32> to vector<8x8xbf16>
    %cst_12 = arith.constant dense<0.000000e+00> : vector<8x8xf32>
    %49 = tpu.matmul %48, %36, %cst_12 {dimension_numbers = #tpu.dot_dimension_numbers<[1], [0], [0], [1], [0, 0, 1, 1], [], []>} : vector<8x8xbf16>, vector<8x8xbf16>, vector<8x8xf32> -> vector<8x8xf32>
    %50 = vector.extract_strided_slice %1 {offsets = [0, 24], sizes = [8, 8], strides = [1, 1]} : vector<8x96xbf16> to vector<8x8xbf16>
    %51 = vector.extract_strided_slice %1 {offsets = [0, 56], sizes = [8, 8], strides = [1, 1]} : vector<8x96xbf16> to vector<8x8xbf16>
    %52 = vector.extract_strided_slice %1 {offsets = [0, 88], sizes = [8, 8], strides = [1, 1]} : vector<8x96xbf16> to vector<8x8xbf16>
    %cst_13 = arith.constant dense<0.000000e+00> : vector<8x8xf32>
    %53 = tpu.matmul %50, %51, %cst_13 {dimension_numbers = #tpu.dot_dimension_numbers<[1], [1], [0], [0], [0, 0, 1, 0], [], []>} : vector<8x8xbf16>, vector<8x8xbf16>, vector<8x8xf32> -> vector<8x8xf32>
    %cst_14 = arith.constant dense<0xFF800000> : vector<8xf32>
    %54 = vector.multi_reduction <maximumf>, %53, %cst_14 [1] : vector<8x8xf32> to vector<8xf32>
    %55 = vector.shape_cast %54 : vector<8xf32> to vector<8x1xf32>
    %56 = vector.broadcast %55 : vector<8x1xf32> to vector<8x8xf32>
    %57 = arith.subf %53, %56 : vector<8x8xf32>
    %58 = math.exp %57 : vector<8x8xf32>
    %cst_15 = arith.constant dense<0.000000e+00> : vector<8xf32>
    %59 = vector.multi_reduction <add>, %58, %cst_15 [1] : vector<8x8xf32> to vector<8xf32>
    %60 = vector.shape_cast %59 : vector<8xf32> to vector<8x1xf32>
    %61 = tpu.reciprocal %60 {approx = true} : vector<8x1xf32> -> vector<8x1xf32>
    %62 = vector.broadcast %61 : vector<8x1xf32> to vector<8x8xf32>
    %63 = arith.mulf %58, %62 : vector<8x8xf32>
    %64 = arith.truncf %63 : vector<8x8xf32> to vector<8x8xbf16>
    %cst_16 = arith.constant dense<0.000000e+00> : vector<8x8xf32>
    %65 = tpu.matmul %64, %52, %cst_16 {dimension_numbers = #tpu.dot_dimension_numbers<[1], [0], [0], [1], [0, 0, 1, 1], [], []>} : vector<8x8xbf16>, vector<8x8xbf16>, vector<8x8xf32> -> vector<8x8xf32>
    %66 = tpu.concatenate %17, %33, %49, %65 in 1 : vector<8x8xf32>, vector<8x8xf32>, vector<8x8xf32>, vector<8x8xf32> -> vector<8x32xf32>
    %67 = arith.truncf %66 : vector<8x32xf32> to vector<8x32xbf16>
    %c0_17 = arith.constant 0 : index
    %c0_18 = arith.constant 0 : index
    %c0_19 = arith.constant 0 : index
    %68 = vector.load %arg2[%c0_17, %c0_18, %c0_19] : memref<1x8x32xbf16, #tpu.memory_space<vmem>>, vector<1x8x32xbf16>
    %69 = vector.shape_cast %68 : vector<1x8x32xbf16> to vector<8x32xbf16>
    %70 = vector.shape_cast %67 : vector<8x32xbf16> to vector<1x8x32xbf16>
    tpu.vector_store %arg2[%c0_17, %c0_18, %c0_19], %70 {strides = array<i32>} : memref<1x8x32xbf16, #tpu.memory_space<vmem>>, vector<1x8x32xbf16>,
    return
  }
  func.func @transform_0(%arg0: i32) -> (i32, i32, i32) {
    %c0_i32 = arith.constant 0 : i32
    %c0_i32_0 = arith.constant 0 : i32
    %c0_i32_1 = arith.constant 0 : i32
    return %arg0, %c0_i32, %c0_i32_0 : i32, i32, i32
  }
  func.func @transform_1(%arg0: i32) -> (i32, i32, i32) {
    %c0_i32 = arith.constant 0 : i32
    %c0_i32_0 = arith.constant 0 : i32
    %c0_i32_1 = arith.constant 0 : i32
    return %arg0, %c0_i32, %c0_i32_0 : i32, i32, i32
  }
}

module attributes {stable_mosaic.version = 11 : i64} {
  func.func @_proj_add_ln_kernel(%arg0: i32, %arg1: memref<16x32xbf16, #tpu.memory_space<vmem>>, %arg2: memref<16x32xf32, #tpu.memory_space<vmem>>, %arg3: memref<32x32xbf16, #tpu.memory_space<vmem>>, %arg4: memref<1x32xf32, #tpu.memory_space<vmem>>, %arg5: memref<1x32xf32, #tpu.memory_space<vmem>>, %arg6: memref<1x32xf32, #tpu.memory_space<vmem>>, %arg7: memref<16x32xf32, #tpu.memory_space<vmem>>) attributes {dimension_semantics = [#tpu.dimension_semantics<parallel>], iteration_bounds = array<i64: 1>, scalar_prefetch = 0 : i64, scratch_operands = 0 : i64, tpu.core_type = #tpu.core_type<tc>, window_params = [{transform_indices = @transform_0, window_bounds = array<i64: 16, 32>}, {transform_indices = @transform_1, window_bounds = array<i64: 16, 32>}, {pipeline_mode = #tpu.pipeline_mode<synchronous>, transform_indices = @transform_2, window_bounds = array<i64: 32, 32>}, {pipeline_mode = #tpu.pipeline_mode<synchronous>, transform_indices = @transform_3, window_bounds = array<i64: 1, 32>}, {pipeline_mode = #tpu.pipeline_mode<synchronous>, transform_indices = @transform_4, window_bounds = array<i64: 1, 32>}, {pipeline_mode = #tpu.pipeline_mode<synchronous>, transform_indices = @transform_5, window_bounds = array<i64: 1, 32>}, {transform_indices = @transform_6, window_bounds = array<i64: 16, 32>}]} {
    %c0 = arith.constant 0 : index
    %c0_0 = arith.constant 0 : index
    %0 = vector.load %arg1[%c0, %c0_0] : memref<16x32xbf16, #tpu.memory_space<vmem>>, vector<16x32xbf16>
    %c0_1 = arith.constant 0 : index
    %c0_2 = arith.constant 0 : index
    %1 = vector.load %arg3[%c0_1, %c0_2] : memref<32x32xbf16, #tpu.memory_space<vmem>>, vector<32x32xbf16>
    %cst = arith.constant dense<0.000000e+00> : vector<16x32xf32>
    %2 = tpu.matmul %0, %1, %cst {dimension_numbers = #tpu.dot_dimension_numbers<[1], [0], [0], [1], [0, 0, 1, 1], [], []>} : vector<16x32xbf16>, vector<32x32xbf16>, vector<16x32xf32> -> vector<16x32xf32>
    %c0_3 = arith.constant 0 : index
    %c0_4 = arith.constant 0 : index
    %3 = vector.load %arg4[%c0_3, %c0_4] : memref<1x32xf32, #tpu.memory_space<vmem>>, vector<1x32xf32>
    %4 = vector.broadcast %3 : vector<1x32xf32> to vector<16x32xf32>
    %5 = arith.addf %2, %4 : vector<16x32xf32>
    %c0_5 = arith.constant 0 : index
    %c0_6 = arith.constant 0 : index
    %6 = vector.load %arg2[%c0_5, %c0_6] : memref<16x32xf32, #tpu.memory_space<vmem>>, vector<16x32xf32>
    %7 = arith.addf %6, %5 : vector<16x32xf32>
    %cst_7 = arith.constant dense<0.000000e+00> : vector<16xf32>
    %8 = vector.multi_reduction <add>, %7, %cst_7 [1] : vector<16x32xf32> to vector<16xf32>
    %9 = vector.shape_cast %8 : vector<16xf32> to vector<16x1xf32>
    %cst_8 = arith.constant 3.200000e+01 : f32
    %10 = vector.broadcast %cst_8 : f32 to vector<16x1xf32>
    %11 = arith.divf %9, %10 : vector<16x1xf32>
    %12 = vector.broadcast %11 : vector<16x1xf32> to vector<16x32xf32>
    %13 = arith.subf %7, %12 : vector<16x32xf32>
    %14 = arith.mulf %13, %13 : vector<16x32xf32>
    %cst_9 = arith.constant dense<0.000000e+00> : vector<16xf32>
    %15 = vector.multi_reduction <add>, %14, %cst_9 [1] : vector<16x32xf32> to vector<16xf32>
    %16 = vector.shape_cast %15 : vector<16xf32> to vector<16x1xf32>
    %cst_10 = arith.constant 3.200000e+01 : f32
    %17 = vector.broadcast %cst_10 : f32 to vector<16x1xf32>
    %18 = arith.divf %16, %17 : vector<16x1xf32>
    %19 = vector.broadcast %11 : vector<16x1xf32> to vector<16x32xf32>
    %20 = arith.subf %7, %19 : vector<16x32xf32>
    %cst_11 = arith.constant 9.99999974E-6 : f32
    %21 = vector.broadcast %cst_11 : f32 to vector<16x1xf32>
    %22 = arith.addf %18, %21 : vector<16x1xf32>
    %23 = math.rsqrt %22 : vector<16x1xf32>
    %24 = vector.broadcast %23 : vector<16x1xf32> to vector<16x32xf32>
    %25 = arith.mulf %20, %24 : vector<16x32xf32>
    %c0_12 = arith.constant 0 : index
    %c0_13 = arith.constant 0 : index
    %26 = vector.load %arg5[%c0_12, %c0_13] : memref<1x32xf32, #tpu.memory_space<vmem>>, vector<1x32xf32>
    %27 = vector.broadcast %26 : vector<1x32xf32> to vector<16x32xf32>
    %28 = arith.mulf %25, %27 : vector<16x32xf32>
    %c0_14 = arith.constant 0 : index
    %c0_15 = arith.constant 0 : index
    %29 = vector.load %arg6[%c0_14, %c0_15] : memref<1x32xf32, #tpu.memory_space<vmem>>, vector<1x32xf32>
    %30 = vector.broadcast %29 : vector<1x32xf32> to vector<16x32xf32>
    %31 = arith.addf %28, %30 : vector<16x32xf32>
    %c0_16 = arith.constant 0 : index
    %c0_17 = arith.constant 0 : index
    %32 = vector.load %arg7[%c0_16, %c0_17] : memref<16x32xf32, #tpu.memory_space<vmem>>, vector<16x32xf32>
    tpu.vector_store %arg7[%c0_16, %c0_17], %31 {strides = array<i32>} : memref<16x32xf32, #tpu.memory_space<vmem>>, vector<16x32xf32>,
    return
  }
  func.func @transform_0(%arg0: i32) -> (i32, i32) {
    %c0_i32 = arith.constant 0 : i32
    %c0_i32_0 = arith.constant 0 : i32
    return %arg0, %c0_i32 : i32, i32
  }
  func.func @transform_1(%arg0: i32) -> (i32, i32) {
    %c0_i32 = arith.constant 0 : i32
    %c0_i32_0 = arith.constant 0 : i32
    return %arg0, %c0_i32 : i32, i32
  }
  func.func @transform_2(%arg0: i32) -> (i32, i32) {
    %c0_i32 = arith.constant 0 : i32
    %c0_i32_0 = arith.constant 0 : i32
    %c0_i32_1 = arith.constant 0 : i32
    return %c0_i32, %c0_i32_0 : i32, i32
  }
  func.func @transform_3(%arg0: i32) -> (i32, i32) {
    %c0_i32 = arith.constant 0 : i32
    %c0_i32_0 = arith.constant 0 : i32
    %c0_i32_1 = arith.constant 0 : i32
    return %c0_i32, %c0_i32_0 : i32, i32
  }
  func.func @transform_4(%arg0: i32) -> (i32, i32) {
    %c0_i32 = arith.constant 0 : i32
    %c0_i32_0 = arith.constant 0 : i32
    %c0_i32_1 = arith.constant 0 : i32
    return %c0_i32, %c0_i32_0 : i32, i32
  }
  func.func @transform_5(%arg0: i32) -> (i32, i32) {
    %c0_i32 = arith.constant 0 : i32
    %c0_i32_0 = arith.constant 0 : i32
    %c0_i32_1 = arith.constant 0 : i32
    return %c0_i32, %c0_i32_0 : i32, i32
  }
  func.func @transform_6(%arg0: i32) -> (i32, i32) {
    %c0_i32 = arith.constant 0 : i32
    %c0_i32_0 = arith.constant 0 : i32
    return %arg0, %c0_i32 : i32, i32
  }
}

module attributes {stable_mosaic.version = 11 : i64} {
  func.func @_matmul_bias_kernel(%arg0: i32, %arg1: memref<16x32xf32, #tpu.memory_space<vmem>>, %arg2: memref<32x96xbf16, #tpu.memory_space<vmem>>, %arg3: memref<1x96xf32, #tpu.memory_space<vmem>>, %arg4: memref<16x96xbf16, #tpu.memory_space<vmem>>) attributes {dimension_semantics = [#tpu.dimension_semantics<parallel>], iteration_bounds = array<i64: 1>, scalar_prefetch = 0 : i64, scratch_operands = 0 : i64, tpu.core_type = #tpu.core_type<tc>, window_params = [{transform_indices = @transform_0, window_bounds = array<i64: 16, 32>}, {pipeline_mode = #tpu.pipeline_mode<synchronous>, transform_indices = @transform_1, window_bounds = array<i64: 32, 96>}, {pipeline_mode = #tpu.pipeline_mode<synchronous>, transform_indices = @transform_2, window_bounds = array<i64: 1, 96>}, {transform_indices = @transform_3, window_bounds = array<i64: 16, 96>}]} {
    %c0 = arith.constant 0 : index
    %c0_0 = arith.constant 0 : index
    %0 = vector.load %arg1[%c0, %c0_0] : memref<16x32xf32, #tpu.memory_space<vmem>>, vector<16x32xf32>
    %1 = arith.truncf %0 : vector<16x32xf32> to vector<16x32xbf16>
    %c0_1 = arith.constant 0 : index
    %c0_2 = arith.constant 0 : index
    %2 = vector.load %arg2[%c0_1, %c0_2] : memref<32x96xbf16, #tpu.memory_space<vmem>>, vector<32x96xbf16>
    %cst = arith.constant dense<0.000000e+00> : vector<16x96xf32>
    %3 = tpu.matmul %1, %2, %cst {dimension_numbers = #tpu.dot_dimension_numbers<[1], [0], [0], [1], [0, 0, 1, 1], [], []>} : vector<16x32xbf16>, vector<32x96xbf16>, vector<16x96xf32> -> vector<16x96xf32>
    %c0_3 = arith.constant 0 : index
    %c0_4 = arith.constant 0 : index
    %4 = vector.load %arg3[%c0_3, %c0_4] : memref<1x96xf32, #tpu.memory_space<vmem>>, vector<1x96xf32>
    %5 = vector.broadcast %4 : vector<1x96xf32> to vector<16x96xf32>
    %6 = arith.addf %3, %5 : vector<16x96xf32>
    %7 = arith.truncf %6 : vector<16x96xf32> to vector<16x96xbf16>
    %c0_5 = arith.constant 0 : index
    %c0_6 = arith.constant 0 : index
    %8 = vector.load %arg4[%c0_5, %c0_6] : memref<16x96xbf16, #tpu.memory_space<vmem>>, vector<16x96xbf16>
    tpu.vector_store %arg4[%c0_5, %c0_6], %7 {strides = array<i32>} : memref<16x96xbf16, #tpu.memory_space<vmem>>, vector<16x96xbf16>,
    return
  }
  func.func @transform_0(%arg0: i32) -> (i32, i32) {
    %c0_i32 = arith.constant 0 : i32
    %c0_i32_0 = arith.constant 0 : i32
    return %arg0, %c0_i32 : i32, i32
  }
  func.func @transform_1(%arg0: i32) -> (i32, i32) {
    %c0_i32 = arith.constant 0 : i32
    %c0_i32_0 = arith.constant 0 : i32
    %c0_i32_1 = arith.constant 0 : i32
    return %c0_i32, %c0_i32_0 : i32, i32
  }
  func.func @transform_2(%arg0: i32) -> (i32, i32) {
    %c0_i32 = arith.constant 0 : i32
    %c0_i32_0 = arith.constant 0 : i32
    %c0_i32_1 = arith.constant 0 : i32
    return %c0_i32, %c0_i32_0 : i32, i32
  }
  func.func @transform_3(%arg0: i32) -> (i32, i32) {
    %c0_i32 = arith.constant 0 : i32
    %c0_i32_0 = arith.constant 0 : i32
    return %arg0, %c0_i32 : i32, i32
  }
}

module attributes {stable_mosaic.version = 11 : i64} {
  func.func @_ffn_add_ln_kernel(%arg0: i32, %arg1: memref<16x32xf32, #tpu.memory_space<vmem>>, %arg2: memref<32x64xbf16, #tpu.memory_space<vmem>>, %arg3: memref<1x64xf32, #tpu.memory_space<vmem>>, %arg4: memref<64x32xbf16, #tpu.memory_space<vmem>>, %arg5: memref<1x32xf32, #tpu.memory_space<vmem>>, %arg6: memref<1x32xf32, #tpu.memory_space<vmem>>, %arg7: memref<1x32xf32, #tpu.memory_space<vmem>>, %arg8: memref<16x32xf32, #tpu.memory_space<vmem>>) attributes {dimension_semantics = [#tpu.dimension_semantics<parallel>], iteration_bounds = array<i64: 1>, scalar_prefetch = 0 : i64, scratch_operands = 0 : i64, tpu.core_type = #tpu.core_type<tc>, window_params = [{transform_indices = @transform_0, window_bounds = array<i64: 16, 32>}, {pipeline_mode = #tpu.pipeline_mode<synchronous>, transform_indices = @transform_1, window_bounds = array<i64: 32, 64>}, {pipeline_mode = #tpu.pipeline_mode<synchronous>, transform_indices = @transform_2, window_bounds = array<i64: 1, 64>}, {pipeline_mode = #tpu.pipeline_mode<synchronous>, transform_indices = @transform_3, window_bounds = array<i64: 64, 32>}, {pipeline_mode = #tpu.pipeline_mode<synchronous>, transform_indices = @transform_4, window_bounds = array<i64: 1, 32>}, {pipeline_mode = #tpu.pipeline_mode<synchronous>, transform_indices = @transform_5, window_bounds = array<i64: 1, 32>}, {pipeline_mode = #tpu.pipeline_mode<synchronous>, transform_indices = @transform_6, window_bounds = array<i64: 1, 32>}, {transform_indices = @transform_7, window_bounds = array<i64: 16, 32>}]} {
    %c0 = arith.constant 0 : index
    %c0_0 = arith.constant 0 : index
    %0 = vector.load %arg1[%c0, %c0_0] : memref<16x32xf32, #tpu.memory_space<vmem>>, vector<16x32xf32>
    %1 = arith.truncf %0 : vector<16x32xf32> to vector<16x32xbf16>
    %c0_1 = arith.constant 0 : index
    %c0_2 = arith.constant 0 : index
    %2 = vector.load %arg2[%c0_1, %c0_2] : memref<32x64xbf16, #tpu.memory_space<vmem>>, vector<32x64xbf16>
    %cst = arith.constant dense<0.000000e+00> : vector<16x64xf32>
    %3 = tpu.matmul %1, %2, %cst {dimension_numbers = #tpu.dot_dimension_numbers<[1], [0], [0], [1], [0, 0, 1, 1], [], []>} : vector<16x32xbf16>, vector<32x64xbf16>, vector<16x64xf32> -> vector<16x64xf32>
    %c0_3 = arith.constant 0 : index
    %c0_4 = arith.constant 0 : index
    %4 = vector.load %arg3[%c0_3, %c0_4] : memref<1x64xf32, #tpu.memory_space<vmem>>, vector<1x64xf32>
    %5 = vector.broadcast %4 : vector<1x64xf32> to vector<16x64xf32>
    %6 = arith.addf %3, %5 : vector<16x64xf32>
    %cst_5 = arith.constant 0.000000e+00 : f32
    %7 = vector.broadcast %cst_5 : f32 to vector<16x64xf32>
    %8 = arith.maximumf %6, %7 : vector<16x64xf32>
    %9 = arith.truncf %8 : vector<16x64xf32> to vector<16x64xbf16>
    %c0_6 = arith.constant 0 : index
    %c0_7 = arith.constant 0 : index
    %10 = vector.load %arg4[%c0_6, %c0_7] : memref<64x32xbf16, #tpu.memory_space<vmem>>, vector<64x32xbf16>
    %cst_8 = arith.constant dense<0.000000e+00> : vector<16x32xf32>
    %11 = tpu.matmul %9, %10, %cst_8 {dimension_numbers = #tpu.dot_dimension_numbers<[1], [0], [0], [1], [0, 0, 1, 1], [], []>} : vector<16x64xbf16>, vector<64x32xbf16>, vector<16x32xf32> -> vector<16x32xf32>
    %c0_9 = arith.constant 0 : index
    %c0_10 = arith.constant 0 : index
    %12 = vector.load %arg5[%c0_9, %c0_10] : memref<1x32xf32, #tpu.memory_space<vmem>>, vector<1x32xf32>
    %13 = vector.broadcast %12 : vector<1x32xf32> to vector<16x32xf32>
    %14 = arith.addf %11, %13 : vector<16x32xf32>
    %15 = arith.addf %0, %14 : vector<16x32xf32>
    %cst_11 = arith.constant dense<0.000000e+00> : vector<16xf32>
    %16 = vector.multi_reduction <add>, %15, %cst_11 [1] : vector<16x32xf32> to vector<16xf32>
    %17 = vector.shape_cast %16 : vector<16xf32> to vector<16x1xf32>
    %cst_12 = arith.constant 3.200000e+01 : f32
    %18 = vector.broadcast %cst_12 : f32 to vector<16x1xf32>
    %19 = arith.divf %17, %18 : vector<16x1xf32>
    %20 = vector.broadcast %19 : vector<16x1xf32> to vector<16x32xf32>
    %21 = arith.subf %15, %20 : vector<16x32xf32>
    %22 = arith.mulf %21, %21 : vector<16x32xf32>
    %cst_13 = arith.constant dense<0.000000e+00> : vector<16xf32>
    %23 = vector.multi_reduction <add>, %22, %cst_13 [1] : vector<16x32xf32> to vector<16xf32>
    %24 = vector.shape_cast %23 : vector<16xf32> to vector<16x1xf32>
    %cst_14 = arith.constant 3.200000e+01 : f32
    %25 = vector.broadcast %cst_14 : f32 to vector<16x1xf32>
    %26 = arith.divf %24, %25 : vector<16x1xf32>
    %27 = vector.broadcast %19 : vector<16x1xf32> to vector<16x32xf32>
    %28 = arith.subf %15, %27 : vector<16x32xf32>
    %cst_15 = arith.constant 9.99999974E-6 : f32
    %29 = vector.broadcast %cst_15 : f32 to vector<16x1xf32>
    %30 = arith.addf %26, %29 : vector<16x1xf32>
    %31 = math.rsqrt %30 : vector<16x1xf32>
    %32 = vector.broadcast %31 : vector<16x1xf32> to vector<16x32xf32>
    %33 = arith.mulf %28, %32 : vector<16x32xf32>
    %c0_16 = arith.constant 0 : index
    %c0_17 = arith.constant 0 : index
    %34 = vector.load %arg6[%c0_16, %c0_17] : memref<1x32xf32, #tpu.memory_space<vmem>>, vector<1x32xf32>
    %35 = vector.broadcast %34 : vector<1x32xf32> to vector<16x32xf32>
    %36 = arith.mulf %33, %35 : vector<16x32xf32>
    %c0_18 = arith.constant 0 : index
    %c0_19 = arith.constant 0 : index
    %37 = vector.load %arg7[%c0_18, %c0_19] : memref<1x32xf32, #tpu.memory_space<vmem>>, vector<1x32xf32>
    %38 = vector.broadcast %37 : vector<1x32xf32> to vector<16x32xf32>
    %39 = arith.addf %36, %38 : vector<16x32xf32>
    %c0_20 = arith.constant 0 : index
    %c0_21 = arith.constant 0 : index
    %40 = vector.load %arg8[%c0_20, %c0_21] : memref<16x32xf32, #tpu.memory_space<vmem>>, vector<16x32xf32>
    tpu.vector_store %arg8[%c0_20, %c0_21], %39 {strides = array<i32>} : memref<16x32xf32, #tpu.memory_space<vmem>>, vector<16x32xf32>,
    return
  }
  func.func @transform_0(%arg0: i32) -> (i32, i32) {
    %c0_i32 = arith.constant 0 : i32
    %c0_i32_0 = arith.constant 0 : i32
    return %arg0, %c0_i32 : i32, i32
  }
  func.func @transform_1(%arg0: i32) -> (i32, i32) {
    %c0_i32 = arith.constant 0 : i32
    %c0_i32_0 = arith.constant 0 : i32
    %c0_i32_1 = arith.constant 0 : i32
    return %c0_i32, %c0_i32_0 : i32, i32
  }
  func.func @transform_2(%arg0: i32) -> (i32, i32) {
    %c0_i32 = arith.constant 0 : i32
    %c0_i32_0 = arith.constant 0 : i32
    %c0_i32_1 = arith.constant 0 : i32
    return %c0_i32, %c0_i32_0 : i32, i32
  }
  func.func @transform_3(%arg0: i32) -> (i32, i32) {
    %c0_i32 = arith.constant 0 : i32
    %c0_i32_0 = arith.constant 0 : i32
    %c0_i32_1 = arith.constant 0 : i32
    return %c0_i32, %c0_i32_0 : i32, i32
  }
  func.func @transform_4(%arg0: i32) -> (i32, i32) {
    %c0_i32 = arith.constant 0 : i32
    %c0_i32_0 = arith.constant 0 : i32
    %c0_i32_1 = arith.constant 0 : i32
    return %c0_i32, %c0_i32_0 : i32, i32
  }
  func.func @transform_5(%arg0: i32) -> (i32, i32) {
    %c0_i32 = arith.constant 0 : i32
    %c0_i32_0 = arith.constant 0 : i32
    %c0_i32_1 = arith.constant 0 : i32
    return %c0_i32, %c0_i32_0 : i32, i32
  }
  func.func @transform_6(%arg0: i32) -> (i32, i32) {
    %c0_i32 = arith.constant 0 : i32
    %c0_i32_0 = arith.constant 0 : i32
    %c0_i32_1 = arith.constant 0 : i32
    return %c0_i32, %c0_i32_0 : i32, i32
  }
  func.func @transform_7(%arg0: i32) -> (i32, i32) {
    %c0_i32 = arith.constant 0 : i32
    %c0_i32_0 = arith.constant 0 : i32
    return %arg0, %c0_i32 : i32, i32
  }
}

</mosaic_0001>

<llo_original>
// kernel: tpu_custom_call.1
$region0: #{tpu_custom_call.1}
  #allocation0 [shape = 'u32[]', space=smem, size = 0x4, offset = 0x4, fixed_abs, tag = 'smem constant byte address 0x4 - core index']
  #allocation1 [shape = 'u32[144,128]{1,0:T(1,128)}', space=vmem, size = 0x12000, scoped, tag = 'internal scratch']
  %s0 = inlined_call_operand.hbm [shape: f32[8,128], index: 0, kind: input, shape index: {}]
  %s1 = inlined_call_operand.hbm [shape: f32[8,128], index: 1, kind: output, shape index: {}]
  %s2 = sld [smem:[#allocation0]]
  $region41: #{tpu_custom_call.1} parent=0
    _
  %s4 = ssub.s32 1, %s2
  %s5 = scalar_select 0, %s4, %s2
  $region1: #{tpu_custom_call.1} parent=0
    #allocation2 [shape = 'u8[4096]{0}', space=vmem, size = 0x1000, scoped, tag = 'input window, operand 0, single buffered']
    #allocation3 [shape = 's32[2]{0}', space=sflag, size = 0x8, scoped, tag = 'scoped memory for tpu_custom_call.1']
    #allocation4 [shape = 's32[2]{0}', space=sflag, size = 0x8, scoped, tag = 'scoped memory for tpu_custom_call.1']
    #allocation5 [shape = 'u8[4096]{0}', space=vmem, size = 0x1000, scoped, tag = 'output window, operand 0, single buffered']
    %6 = vsyncpa [#allocation3], 0
    %7 = vsyncpa [#allocation4], 0
    loop: start=0, step=1, limit=4
    $region2: #{tpu_custom_call.1} parent=1 // loop_pre_header
      _
    $region3: #{tpu_custom_call.1} parent=1 // loop_header
      %s9 = sphi 0, %s13
      %p10 = scmp.ge.s32.totalorder %s9, 4
      %s17 = sphi 0, %s17
      %s19 = sphi 0, %s17
      %s20 = sphi 0, %s19
      %s34 = sphi 0, %s20
      %s38 = sphi 0, %s38
      %s40 = sphi 0, %s38
      %s41 = sphi 0, %s40
      %s55 = sphi 0, %s41
    $region4: #{tpu_custom_call.1} parent=1 // loop_header_branch
      %12 = sbr.rel (%p10) target = $region8
    $region5: #{tpu_custom_call.1} parent=1 // loop_body
      %s14 = ssub.s32 %s9, 1
      %s15 = ssub.s32 %s9, 2
      %s16 = sadd.s32 %s9, 1
      %s18 = sadd.s32 %s17, 1
      %p21 = scmp.eq.s32.totalorder %s9, 1
      %p22 = scmp.ne.s32.totalorder %s17, %s19
      %p23 = scmp.eq.s32.totalorder %s9, 0
      %p24 = por %p22, %p23
      %p25 = scmp.ne.s32.totalorder %s17, %s19
      %p26 = scmp.eq.s32.totalorder %s14, 1
      %p27 = por %p25, %p26
      %p28 = scmp.ne.s32.totalorder %s19, %s20
      %p29 = scmp.eq.s32.totalorder %s14, 0
      %p30 = por %p28, %p29
      %p31 = scmp.ne.s32.totalorder %s19, %s20
      %p32 = scmp.eq.s32.totalorder %s15, 1
      %p33 = por %p31, %p32
      %p35 = scmp.ne.s32.totalorder %s20, %s34
      %p36 = scmp.eq.s32.totalorder %s15, 0
      %p37 = por %p35, %p36
      %s39 = sadd.s32 %s38, 1
      %p42 = scmp.eq.s32.totalorder %s9, 1
      %p43 = scmp.ne.s32.totalorder %s38, %s40
      %p44 = scmp.eq.s32.totalorder %s9, 0
      %p45 = por %p43, %p44
      %p46 = scmp.ne.s32.totalorder %s38, %s40
      %p47 = scmp.eq.s32.totalorder %s14, 1
      %p48 = por %p46, %p47
      %p49 = scmp.ne.s32.totalorder %s40, %s41
      %p50 = scmp.eq.s32.totalorder %s14, 0
      %p51 = por %p49, %p50
      %p52 = scmp.ne.s32.totalorder %s40, %s41
      %p53 = scmp.eq.s32.totalorder %s15, 1
      %p54 = por %p52, %p53
      %p56 = scmp.ne.s32.totalorder %s41, %s55
      %p57 = scmp.eq.s32.totalorder %s15, 0
      %p58 = por %p56, %p57
      %p59 = scmp.le.s32.totalorder 1, %s9
      %p60 = scmp.lt.s32.totalorder %s9, 3
      %p61 = pnand %p59, %p60
      %p62 = pneg %p61
      // Predicated region
      $region9: #{tpu_custom_call.1} parent=5 // pred_check
        _
      $region10: #{tpu_custom_call.1} parent=5 // pred_check_branch
        %64 = sbr.rel (%p61) target = $region12
      $region11: #{tpu_custom_call.1} parent=5 // pred_region
        %s65 = ssub.s32 %s9, 1
        // Predicated region
        $region13: #{tpu_custom_call.1} parent=11 // pred_check
          %p66 = pneg %p30
        $region14: #{tpu_custom_call.1} parent=11 // pred_check_branch
          %68 = sbr.rel (%p66) target = $region16
        $region15: #{tpu_custom_call.1} parent=11 // pred_region
          %s70 = ssub.s32 128, 128
          %71 = vsyncadd [#allocation3], %s70
          %s73 = sshll.u32 [#allocation2], 4
          %s74 = int_to_ptr.vmem [resolvable:$true] %s73
          %76 = dma.hbm_to_vmem [thread:$0]  %s0, 128, %s74, [#allocation3]
        $region16: #{tpu_custom_call.1} parent=11 // pred_fallthru
          _
      $region12: #{tpu_custom_call.1} parent=5 // pred_fallthru
        _
      %p77 = scmp.lt.s32.totalorder %s9, 2
      // Predicated region
      $region17: #{tpu_custom_call.1} parent=5 // pred_check
        %p78 = pneg %p77
      $region18: #{tpu_custom_call.1} parent=5 // pred_check_branch
        %80 = sbr.rel (%p78) target = $region20
      $region19: #{tpu_custom_call.1} parent=5 // pred_region
        _
      $region20: #{tpu_custom_call.1} parent=5 // pred_fallthru
        _
      %p81 = scmp.le.s32.totalorder 1, %s9
      %p82 = scmp.lt.s32.totalorder %s9, 3
      %p83 = pnand %p81, %p82
      %p84 = pneg %p83
      // Predicated region
      $region21: #{tpu_custom_call.1} parent=5 // pred_check
        _
      $region22: #{tpu_custom_call.1} parent=5 // pred_check_branch
        %86 = sbr.rel (%p83) target = $region24
      $region23: #{tpu_custom_call.1} parent=5 // pred_region
        %s87 = ssub.s32 %s9, 1
        // Predicated region
        $region25: #{tpu_custom_call.1} parent=23 // pred_check
          %p88 = pneg %p30
        $region26: #{tpu_custom_call.1} parent=23 // pred_check_branch
          %90 = sbr.rel (%p88) target = $region28
        $region27: #{tpu_custom_call.1} parent=23 // pred_region
          %91 = dma.done [#allocation3], 128
        $region28: #{tpu_custom_call.1} parent=23 // pred_fallthru
          _
        %p92 = pneg %p30
        %p93 = pneg %p27
        %p94 = pneg %p51
        %p95 = pneg %p48
        %v96 = vld [vmem:[#allocation2] sm:$0xff]
        %v97 = vmul.f32 %v96, 2.0
        %98 = vst [vmem:[#allocation5] sm:$0xff] %v97
        // Predicated region
        $region29: #{tpu_custom_call.1} parent=23 // pred_check
          %p99 = pneg %p48
        $region30: #{tpu_custom_call.1} parent=23 // pred_check_branch
          %101 = sbr.rel (%p99) target = $region32
        $region31: #{tpu_custom_call.1} parent=23 // pred_region
          %s103 = ssub.s32 128, 128
          %104 = vsyncadd [#allocation4], %s103
          %s106 = sshll.u32 [#allocation5], 4
          %s107 = int_to_ptr.vmem [resolvable:$true] %s106
          %109 = dma.vmem_to_hbm [thread:$0]  %s107, 128, %s1, [#allocation4]
        $region32: #{tpu_custom_call.1} parent=23 // pred_fallthru
          _
        // Predicated region
        $region33: #{tpu_custom_call.1} parent=23 // pred_check
          %p110 = pneg %p48
        $region34: #{tpu_custom_call.1} parent=23 // pred_check_branch
          %112 = sbr.rel (%p110) target = $region36
        $region35: #{tpu_custom_call.1} parent=23 // pred_region
          %113 = dma.done [#allocation4], 128
        $region36: #{tpu_custom_call.1} parent=23 // pred_fallthru
          _
      $region24: #{tpu_custom_call.1} parent=5 // pred_fallthru
        _
      %p114 = scmp.le.s32.totalorder 2, %s9
      // Predicated region
      $region37: #{tpu_custom_call.1} parent=5 // pred_check
        %p115 = pneg %p114
      $region38: #{tpu_custom_call.1} parent=5 // pred_check_branch
        %117 = sbr.rel (%p115) target = $region40
      $region39: #{tpu_custom_call.1} parent=5 // pred_region
        %s118 = ssub.s32 %s9, 2
      $region40: #{tpu_custom_call.1} parent=5 // pred_fallthru
        _
    $region6: #{tpu_custom_call.1} parent=1 // loop_footer
      %s13 = sadd.s32 1, %s9
    $region7: #{tpu_custom_call.1} parent=1 // loop_footer_branch
      %8 = sbr.rel target = $region3
    $region8: #{tpu_custom_call.1} parent=1 // loop_exit
      _
    %119 = vsyncpa [#allocation3], 1
    %s120 = scalar_lea.sflag [#allocation3], 1
    %121 = vsyncpa %s120, 1
    %122 = vsyncpa [#allocation4], 1
    %s123 = scalar_lea.sflag [#allocation4], 1
    %124 = vsyncpa %s123, 1

// kernel: bert_forward.11
$region0: #{bert_forward.11}
  #allocation0 [shape = 'u32[]', space=smem, size = 0x4, offset = 0x4, fixed_abs, tag = 'smem constant byte address 0x4 - core index']
  #allocation1 [shape = 'u32[144,128]{1,0:T(1,128)}', space=vmem, size = 0x12000, scoped, tag = 'internal scratch']
  %s0 = inlined_call_operand.vmem [shape: f32[16,32], index: 0, kind: input, shape index: {}]
  %s1 = inlined_call_operand.vmem [shape: bf16[32,64], index: 1, kind: input, shape index: {}]
  %s2 = inlined_call_operand.vmem [shape: f32[1,64], index: 2, kind: input, shape index: {}]
  %s3 = inlined_call_operand.vmem [shape: bf16[64,32], index: 3, kind: input, shape index: {}]
  %s4 = inlined_call_operand.vmem [shape: f32[1,32], index: 4, kind: input, shape index: {}]
  %s5 = inlined_call_operand.vmem [shape: f32[1,32], index: 5, kind: input, shape index: {}]
  %s6 = inlined_call_operand.vmem [shape: f32[1,32], index: 6, kind: input, shape index: {}]
  %s7 = inlined_call_operand.vmem [shape: f32[16,32], index: 7, kind: output, shape index: {}]
  %s8 = sld [smem:[#allocation0]]
  $region38: #{bert_forward.11} parent=0
    _
  %s10 = ssub.s32 1, %s8
  %s11 = scalar_select 0, %s10, %s8
  // Predicated region
  $region2: #{bert_forward.11} parent=0 // pred_check
    _
  $region3: #{bert_forward.11} parent=0 // pred_check_branch
    %13 = sbr.rel (0) target = $region5
  $region4: #{bert_forward.11} parent=0 // pred_region
    _
  $region5: #{bert_forward.11} parent=0 // pred_fallthru
    _
  // Predicated region
  $region6: #{bert_forward.11} parent=0 // pred_check
    _
  $region7: #{bert_forward.11} parent=0 // pred_check_branch
    %15 = sbr.rel (0) target = $region9
  $region8: #{bert_forward.11} parent=0 // pred_region
    _
  $region9: #{bert_forward.11} parent=0 // pred_fallthru
    _
  // Predicated region
  $region10: #{bert_forward.11} parent=0 // pred_check
    _
  $region11: #{bert_forward.11} parent=0 // pred_check_branch
    %17 = sbr.rel (0) target = $region13
  $region12: #{bert_forward.11} parent=0 // pred_region
    _
  $region13: #{bert_forward.11} parent=0 // pred_fallthru
    _
  // Predicated region
  $region14: #{bert_forward.11} parent=0 // pred_check
    _
  $region15: #{bert_forward.11} parent=0 // pred_check_branch
    %19 = sbr.rel (0) target = $region17
  $region16: #{bert_forward.11} parent=0 // pred_region
    _
  $region17: #{bert_forward.11} parent=0 // pred_fallthru
    _
  // Predicated region
  $region18: #{bert_forward.11} parent=0 // pred_check
    _
  $region19: #{bert_forward.11} parent=0 // pred_check_branch
    %21 = sbr.rel (0) target = $region21
  $region20: #{bert_forward.11} parent=0 // pred_region
    _
  $region21: #{bert_forward.11} parent=0 // pred_fallthru
    _
  // Predicated region
  $region22: #{bert_forward.11} parent=0 // pred_check
    _
  $region23: #{bert_forward.11} parent=0 // pred_check_branch
    %23 = sbr.rel (0) target = $region25
  $region24: #{bert_forward.11} parent=0 // pred_region
    _
  $region25: #{bert_forward.11} parent=0 // pred_fallthru
    _
  // Predicated region
  $region26: #{bert_forward.11} parent=0 // pred_check
    _
  $region27: #{bert_forward.11} parent=0 // pred_check_branch
    %25 = sbr.rel (0) target = $region29
  $region28: #{bert_forward.11} parent=0 // pred_region
    _
  $region29: #{bert_forward.11} parent=0 // pred_fallthru
    _
  %v27 = vld [vmem:[%s0] sm:$0xff]
  %v28 = vld [vmem:[%s0 + $0x8] sm:$0xff]
  %v29 = vpack.c.bf16 %v28, %v27
  %v30 = vld [vmem:[%s1] sm:$0xf]
  %v31 = vld [vmem:[%s1 + $0x4] sm:$0xf]
  %v32 = vld [vmem:[%s1 + $0x8] sm:$0xf]
  %v33 = vld [vmem:[%s1 + $0xc] sm:$0xf]
  %v34 = vld [vmem:[%s2] sm:$0x1]
  %v36 = vlaneseq
  %v37 = vshrl.u32 %v36, 7
  %v38 = vsub.s32 0, %v37
  %v39 = vrot.slane %v34, %v38
  %v45 = vunpack.c.l.b16 %v30
  %v46 = vunpack.c.l.b16 %v31
  %v47 = vunpack.c.l.b16 %v32
  %v48 = vunpack.c.l.b16 %v33
  %v49 = vpack.c.b16 %v46, %v45
  %v50 = vpack.c.b16 %v48, %v47
  %vm53 = vcmask 261120
  %v55 = vsel %vm53, %v29, 0
  %57 = vmatprep.subr.bf16.mxu0 0
  %58 = vmatpush1.bf16.msra.mxu0 0
  %59 = vmatprep.subr.bf16.mxu0 0
  %60 = vmatpush1.bf16.msra.mxu0 0
  %61 = vmatprep.subr.bf16.mxu0 0
  %62 = vmatpush1.bf16.msra.mxu0 0
  %63 = vmatprep.subr.bf16.mxu0 0
  %64 = vmatpush1.bf16.msra.mxu0 0
  %65 = vmatprep.subr.bf16.mxu0 0
  %66 = vmatpush1.bf16.msra.mxu0 0
  %67 = vmatprep.subr.bf16.mxu0 0
  %68 = vmatpush1.bf16.msra.mxu0 0
  %69 = vmatprep.subr.bf16.mxu0 0
  %70 = vmatpush1.bf16.msra.mxu0 %v50
  %71 = vmatprep.subr.bf16.mxu0 0
  %72 = vmatpush1.bf16.msra.mxu0 %v49
  %73 = vmatprep.subr.bf16.mxu0 0
  %74 = vmatpush2.bf16.msra.mxu0 0
  %75 = vmatprep.subr.bf16.mxu0 0
  %76 = vmatpush2.bf16.msra.mxu0 0
  %77 = vmatprep.subr.bf16.mxu0 0
  %78 = vmatpush2.bf16.msra.mxu0 0
  %79 = vmatprep.subr.bf16.mxu0 0
  %80 = vmatpush2.bf16.msra.mxu0 0
  %81 = vmatprep.subr.bf16.mxu0 0
  %82 = vmatpush2.bf16.msra.mxu0 0
  %83 = vmatprep.subr.bf16.mxu0 0
  %84 = vmatpush2.bf16.msra.mxu0 0
  %85 = vmatprep.subr.bf16.mxu0 0
  %86 = vmatpush2.bf16.msra.mxu0 0
  %87 = vmatprep.subr.bf16.mxu0 0
  %88 = vmatpush2.bf16.msra.mxu0 0
  %89 = vmatprep.mubr.bf16.mxu0 0
  %90 = vmatmul.mubr.bf16.gmra.mxu0 %v55
  %v91 = vpop.f32.mrf.mxu0
  %v92 = vadd.f32 %v39, %v91
  %v93 = vpop.f32.mrf.mxu0
  %v94 = vpop.f32.mrf.mxu0
  %v95 = vadd.f32 %v39, %v94
  %v96 = vpop.f32.mrf.mxu0
  %97 = vdwg.mxu0
  %v98 = vmax.f32 %v92, 0.0
  %v99 = vmax.f32 %v95, 0.0
  %v100 = vpack.c.bf16 %v99, %v98
  %v101 = vld [vmem:[%s3] sm:$0xf]
  %v102 = vld [vmem:[%s3 + $0x4] sm:$0xf]
  %v103 = vld [vmem:[%s3 + $0x8] sm:$0xf]
  %v104 = vld [vmem:[%s3 + $0xc] sm:$0xf]
  %v105 = vld [vmem:[%s3 + $0x10] sm:$0xf]
  %v106 = vld [vmem:[%s3 + $0x14] sm:$0xf]
  %v107 = vld [vmem:[%s3 + $0x18] sm:$0xf]
  %v108 = vld [vmem:[%s3 + $0x1c] sm:$0xf]
  %v109 = vld [vmem:[%s4] sm:$0x1]
  %v111 = vlaneseq
  %v112 = vshrl.u32 %v111, 7
  %v113 = vsub.s32 0, %v112
  %v114 = vrot.slane %v109, %v113
  %v124 = vunpack.c.l.b16 %v101
  %v125 = vunpack.c.l.b16 %v102
  %v126 = vunpack.c.l.b16 %v103
  %v127 = vunpack.c.l.b16 %v104
  %v128 = vunpack.c.l.b16 %v105
  %v129 = vunpack.c.l.b16 %v106
  %v130 = vunpack.c.l.b16 %v107
  %v131 = vunpack.c.l.b16 %v108
  %v132 = vpack.c.b16 %v125, %v124
  %v133 = vpack.c.b16 %v127, %v126
  %v134 = vpack.c.b16 %v129, %v128
  %v135 = vpack.c.b16 %v131, %v130
  %vm140 = vcmask 523264
  %v142 = vsel %vm140, %v100, 0
  %144 = vmatprep.subr.bf16.mxu0 0
  %145 = vmatpush1.bf16.msra.mxu0 0
  %146 = vmatprep.subr.bf16.mxu0 0
  %147 = vmatpush1.bf16.msra.mxu0 0
  %148 = vmatprep.subr.bf16.mxu0 0
  %149 = vmatpush1.bf16.msra.mxu0 0
  %150 = vmatprep.subr.bf16.mxu0 0
  %151 = vmatpush1.bf16.msra.mxu0 0
  %152 = vmatprep.subr.bf16.mxu0 0
  %153 = vmatpush1.bf16.msra.mxu0 %v135
  %154 = vmatprep.subr.bf16.mxu0 0
  %155 = vmatpush1.bf16.msra.mxu0 %v134
  %156 = vmatprep.subr.bf16.mxu0 0
  %157 = vmatpush1.bf16.msra.mxu0 %v133
  %158 = vmatprep.subr.bf16.mxu0 0
  %159 = vmatpush1.bf16.msra.mxu0 %v132
  %160 = vmatprep.subr.bf16.mxu0 0
  %161 = vmatpush2.bf16.msra.mxu0 0
  %162 = vmatprep.subr.bf16.mxu0 0
  %163 = vmatpush2.bf16.msra.mxu0 0
  %164 = vmatprep.subr.bf16.mxu0 0
  %165 = vmatpush2.bf16.msra.mxu0 0
  %166 = vmatprep.subr.bf16.mxu0 0
  %167 = vmatpush2.bf16.msra.mxu0 0
  %168 = vmatprep.subr.bf16.mxu0 0
  %169 = vmatpush2.bf16.msra.mxu0 0
  %170 = vmatprep.subr.bf16.mxu0 0
  %171 = vmatpush2.bf16.msra.mxu0 0
  %172 = vmatprep.subr.bf16.mxu0 0
  %173 = vmatpush2.bf16.msra.mxu0 0
  %174 = vmatprep.subr.bf16.mxu0 0
  %175 = vmatpush2.bf16.msra.mxu0 0
  %176 = vmatprep.mubr.bf16.mxu0 0
  %177 = vmatmul.mubr.bf16.gmra.mxu0 %v142
  %v178 = vpop.f32.mrf.mxu0
  %v179 = vadd.f32 %v114, %v178
  %v180 = vpop.f32.mrf.mxu0
  %v181 = vpop.f32.mrf.mxu0
  %v182 = vadd.f32 %v114, %v181
  %v183 = vpop.f32.mrf.mxu0
  %184 = vdwg.mxu0
  %v185 = vadd.f32 %v27, %v179
  %v186 = vadd.f32 %v28, %v182
  %v187 = vsel %vm53, %v185, 0.0
  %188 = vadd.xlane.f32.xlu0 %v187
  %v189 = vpop.xlane.xlu0 %188
  %v190 = vsel %vm53, %v186, 0.0
  %191 = vadd.xlane.f32.xlu0 %v190
  %v192 = vpop.xlane.xlu0 %191
  %v193 = vrcp.pop 32.0
  %v194 = vmul.f32 %v189, %v193
  %v195 = vmul.f32 %v192, %v193
  %v196 = vsub.f32 %v185, %v194
  %v197 = vsub.f32 %v186, %v195
  %v198 = vmul.f32 %v196, %v196
  %v199 = vmul.f32 %v197, %v197
  %v200 = vsel %vm53, %v198, 0.0
  %201 = vadd.xlane.f32.xlu0 %v200
  %v202 = vpop.xlane.xlu0 %201
  %v203 = vsel %vm53, %v199, 0.0
  %204 = vadd.xlane.f32.xlu0 %v203
  %v205 = vpop.xlane.xlu0 %204
  %v206 = vmul.f32 %v202, %v193
  %v207 = vmul.f32 %v205, %v193
  %v208 = vadd.f32 %v206, 1e-05
  %v209 = vadd.f32 %v207, 1e-05
  %v210 = vrsqrt.pop %v208
  %v211 = vrsqrt.pop %v209
  %v212 = vmul.f32 %v196, %v210
  %v213 = vmul.f32 %v197, %v211
  %v214 = vld [vmem:[%s5] sm:$0x1]
  %v216 = vlaneseq
  %v217 = vshrl.u32 %v216, 7
  %v218 = vsub.s32 0, %v217
  %v219 = vrot.slane %v214, %v218
  %v221 = vmul.f32 %v212, %v219
  %v222 = vmul.f32 %v213, %v219
  %v223 = vld [vmem:[%s6] sm:$0x1]
  %v225 = vlaneseq
  %v226 = vshrl.u32 %v225, 7
  %v227 = vsub.s32 0, %v226
  %v228 = vrot.slane %v223, %v227
  %v230 = vadd.f32 %v221, %v228
  %v231 = vadd.f32 %v222, %v228
  %232 = vst.msk [vmem:[%s7] sm:$0xff] %vm53, %v230
  %233 = vst.msk [vmem:[%s7 + $0x8] sm:$0xff] %vm53, %v231
  // Predicated region
  $region30: #{bert_forward.11} parent=0 // pred_check
    _
  $region31: #{bert_forward.11} parent=0 // pred_check_branch
    %235 = sbr.rel (0) target = $region33
  $region32: #{bert_forward.11} parent=0 // pred_region
    _
  $region33: #{bert_forward.11} parent=0 // pred_fallthru
    _
  // Predicated region
  $region34: #{bert_forward.11} parent=0 // pred_check
    _
  $region35: #{bert_forward.11} parent=0 // pred_check_branch
    %237 = sbr.rel (0) target = $region37
  $region36: #{bert_forward.11} parent=0 // pred_region
    _
  $region37: #{bert_forward.11} parent=0 // pred_fallthru
    _

// kernel: bert_forward.8
$region0: #{bert_forward.8}
  #allocation0 [shape = 'u32[]', space=smem, size = 0x4, offset = 0x4, fixed_abs, tag = 'smem constant byte address 0x4 - core index']
  #allocation1 [shape = 'u32[144,128]{1,0:T(1,128)}', space=vmem, size = 0x12000, scoped, tag = 'internal scratch']
  %s0 = inlined_call_operand.vmem [shape: f32[16,32], index: 0, kind: input, shape index: {}]
  %s1 = inlined_call_operand.vmem [shape: bf16[32,96], index: 1, kind: input, shape index: {}]
  %s2 = inlined_call_operand.vmem [shape: f32[1,96], index: 2, kind: input, shape index: {}]
  %s3 = inlined_call_operand.vmem [shape: bf16[16,96], index: 3, kind: output, shape index: {}]
  %s4 = sld [smem:[#allocation0]]
  $region22: #{bert_forward.8} parent=0
    _
  %s6 = ssub.s32 1, %s4
  %s7 = scalar_select 0, %s6, %s4
  // Predicated region
  $region2: #{bert_forward.8} parent=0 // pred_check
    _
  $region3: #{bert_forward.8} parent=0 // pred_check_branch
    %9 = sbr.rel (0) target = $region5
  $region4: #{bert_forward.8} parent=0 // pred_region
    _
  $region5: #{bert_forward.8} parent=0 // pred_fallthru
    _
  // Predicated region
  $region6: #{bert_forward.8} parent=0 // pred_check
    _
  $region7: #{bert_forward.8} parent=0 // pred_check_branch
    %11 = sbr.rel (0) target = $region9
  $region8: #{bert_forward.8} parent=0 // pred_region
    _
  $region9: #{bert_forward.8} parent=0 // pred_fallthru
    _
  // Predicated region
  $region10: #{bert_forward.8} parent=0 // pred_check
    _
  $region11: #{bert_forward.8} parent=0 // pred_check_branch
    %13 = sbr.rel (0) target = $region13
  $region12: #{bert_forward.8} parent=0 // pred_region
    _
  $region13: #{bert_forward.8} parent=0 // pred_fallthru
    _
  %v15 = vld [vmem:[%s0] sm:$0xff]
  %v16 = vld [vmem:[%s0 + $0x8] sm:$0xff]
  %v17 = vpack.c.bf16 %v16, %v15
  %v18 = vld [vmem:[%s1] sm:$0xf]
  %v19 = vld [vmem:[%s1 + $0x4] sm:$0xf]
  %v20 = vld [vmem:[%s1 + $0x8] sm:$0xf]
  %v21 = vld [vmem:[%s1 + $0xc] sm:$0xf]
  %v22 = vld [vmem:[%s2] sm:$0x1]
  %v24 = vlaneseq
  %v25 = vshrl.u32 %v24, 7
  %v26 = vsub.s32 0, %v25
  %v27 = vrot.slane %v22, %v26
  %v33 = vunpack.c.l.b16 %v18
  %v34 = vunpack.c.l.b16 %v19
  %v35 = vunpack.c.l.b16 %v20
  %v36 = vunpack.c.l.b16 %v21
  %v37 = vpack.c.b16 %v34, %v33
  %v38 = vpack.c.b16 %v36, %v35
  %vm41 = vcmask 261120
  %v43 = vsel %vm41, %v17, 0
  %45 = vmatprep.subr.bf16.mxu0 0
  %46 = vmatpush1.bf16.msra.mxu0 0
  %47 = vmatprep.subr.bf16.mxu0 0
  %48 = vmatpush1.bf16.msra.mxu0 0
  %49 = vmatprep.subr.bf16.mxu0 0
  %50 = vmatpush1.bf16.msra.mxu0 0
  %51 = vmatprep.subr.bf16.mxu0 0
  %52 = vmatpush1.bf16.msra.mxu0 0
  %53 = vmatprep.subr.bf16.mxu0 0
  %54 = vmatpush1.bf16.msra.mxu0 0
  %55 = vmatprep.subr.bf16.mxu0 0
  %56 = vmatpush1.bf16.msra.mxu0 0
  %57 = vmatprep.subr.bf16.mxu0 0
  %58 = vmatpush1.bf16.msra.mxu0 %v38
  %59 = vmatprep.subr.bf16.mxu0 0
  %60 = vmatpush1.bf16.msra.mxu0 %v37
  %61 = vmatprep.subr.bf16.mxu0 0
  %62 = vmatpush2.bf16.msra.mxu0 0
  %63 = vmatprep.subr.bf16.mxu0 0
  %64 = vmatpush2.bf16.msra.mxu0 0
  %65 = vmatprep.subr.bf16.mxu0 0
  %66 = vmatpush2.bf16.msra.mxu0 0
  %67 = vmatprep.subr.bf16.mxu0 0
  %68 = vmatpush2.bf16.msra.mxu0 0
  %69 = vmatprep.subr.bf16.mxu0 0
  %70 = vmatpush2.bf16.msra.mxu0 0
  %71 = vmatprep.subr.bf16.mxu0 0
  %72 = vmatpush2.bf16.msra.mxu0 0
  %73 = vmatprep.subr.bf16.mxu0 0
  %74 = vmatpush2.bf16.msra.mxu0 0
  %75 = vmatprep.subr.bf16.mxu0 0
  %76 = vmatpush2.bf16.msra.mxu0 0
  %77 = vmatprep.mubr.bf16.mxu0 0
  %78 = vmatmul.mubr.bf16.gmra.mxu0 %v43
  %v79 = vpop.f32.mrf.mxu0
  %v80 = vadd.f32 %v27, %v79
  %v81 = vpop.f32.mrf.mxu0
  %v82 = vpop.f32.mrf.mxu0
  %v83 = vadd.f32 %v27, %v82
  %v84 = vpop.f32.mrf.mxu0
  %85 = vdwg.mxu0
  %v86 = vpack.c.bf16 %v83, %v80
  %v88 = vunpack.c.l.b16 %v86
  %v89 = vunpack.c.h.b16 %v86
  %v90 = vpack.c.b16 %v88, %v88
  %v91 = vpack.c.b16 %v89, %v89
  %vm94 = vcmask 781312
  %95 = vst.msk [vmem:[%s3] sm:$0xf] %vm94, %v90
  %96 = vst.msk [vmem:[%s3 + $0x4] sm:$0xf] %vm94, %v91
  // Predicated region
  $region14: #{bert_forward.8} parent=0 // pred_check
    _
  $region15: #{bert_forward.8} parent=0 // pred_check_branch
    %98 = sbr.rel (0) target = $region17
  $region16: #{bert_forward.8} parent=0 // pred_region
    _
  $region17: #{bert_forward.8} parent=0 // pred_fallthru
    _
  // Predicated region
  $region18: #{bert_forward.8} parent=0 // pred_check
    _
  $region19: #{bert_forward.8} parent=0 // pred_check_branch
    %100 = sbr.rel (0) target = $region21
  $region20: #{bert_forward.8} parent=0 // pred_region
    _
  $region21: #{bert_forward.8} parent=0 // pred_fallthru
    _

// kernel: bert_forward.10
$region0: #{bert_forward.10}
  #allocation0 [shape = 'u32[]', space=smem, size = 0x4, offset = 0x4, fixed_abs, tag = 'smem constant byte address 0x4 - core index']
  #allocation1 [shape = 'u32[144,128]{1,0:T(1,128)}', space=vmem, size = 0x12000, scoped, tag = 'internal scratch']
  %s0 = inlined_call_operand.vmem [shape: bf16[16,32], index: 0, kind: input, shape index: {}]
  %s1 = inlined_call_operand.vmem [shape: f32[16,32], index: 1, kind: input, shape index: {}]
  %s2 = inlined_call_operand.vmem [shape: bf16[32,32], index: 2, kind: input, shape index: {}]
  %s3 = inlined_call_operand.vmem [shape: f32[1,32], index: 3, kind: input, shape index: {}]
  %s4 = inlined_call_operand.vmem [shape: f32[1,32], index: 4, kind: input, shape index: {}]
  %s5 = inlined_call_operand.vmem [shape: f32[1,32], index: 5, kind: input, shape index: {}]
  %s6 = inlined_call_operand.vmem [shape: f32[16,32], index: 6, kind: output, shape index: {}]
  %s7 = sld [smem:[#allocation0]]
  $region34: #{bert_forward.10} parent=0
    _
  %s9 = ssub.s32 1, %s7
  %s10 = scalar_select 0, %s9, %s7
  // Predicated region
  $region2: #{bert_forward.10} parent=0 // pred_check
    _
  $region3: #{bert_forward.10} parent=0 // pred_check_branch
    %12 = sbr.rel (0) target = $region5
  $region4: #{bert_forward.10} parent=0 // pred_region
    _
  $region5: #{bert_forward.10} parent=0 // pred_fallthru
    _
  // Predicated region
  $region6: #{bert_forward.10} parent=0 // pred_check
    _
  $region7: #{bert_forward.10} parent=0 // pred_check_branch
    %14 = sbr.rel (0) target = $region9
  $region8: #{bert_forward.10} parent=0 // pred_region
    _
  $region9: #{bert_forward.10} parent=0 // pred_fallthru
    _
  // Predicated region
  $region10: #{bert_forward.10} parent=0 // pred_check
    _
  $region11: #{bert_forward.10} parent=0 // pred_check_branch
    %16 = sbr.rel (0) target = $region13
  $region12: #{bert_forward.10} parent=0 // pred_region
    _
  $region13: #{bert_forward.10} parent=0 // pred_fallthru
    _
  // Predicated region
  $region14: #{bert_forward.10} parent=0 // pred_check
    _
  $region15: #{bert_forward.10} parent=0 // pred_check_branch
    %18 = sbr.rel (0) target = $region17
  $region16: #{bert_forward.10} parent=0 // pred_region
    _
  $region17: #{bert_forward.10} parent=0 // pred_fallthru
    _
  // Predicated region
  $region18: #{bert_forward.10} parent=0 // pred_check
    _
  $region19: #{bert_forward.10} parent=0 // pred_check_branch
    %20 = sbr.rel (0) target = $region21
  $region20: #{bert_forward.10} parent=0 // pred_region
    _
  $region21: #{bert_forward.10} parent=0 // pred_fallthru
    _
  // Predicated region
  $region22: #{bert_forward.10} parent=0 // pred_check
    _
  $region23: #{bert_forward.10} parent=0 // pred_check_branch
    %22 = sbr.rel (0) target = $region25
  $region24: #{bert_forward.10} parent=0 // pred_region
    _
  $region25: #{bert_forward.10} parent=0 // pred_fallthru
    _
  %v24 = vld [vmem:[%s0] sm:$0xf]
  %v25 = vld [vmem:[%s0 + $0x4] sm:$0xf]
  %v26 = vld [vmem:[%s2] sm:$0xf]
  %v27 = vld [vmem:[%s2 + $0x4] sm:$0xf]
  %v28 = vld [vmem:[%s2 + $0x8] sm:$0xf]
  %v29 = vld [vmem:[%s2 + $0xc] sm:$0xf]
  %v30 = vld [vmem:[%s3] sm:$0x1]
  %v32 = vlaneseq
  %v33 = vshrl.u32 %v32, 7
  %v34 = vsub.s32 0, %v33
  %v35 = vrot.slane %v30, %v34
  %v39 = vunpack.c.l.b16 %v24
  %v40 = vunpack.c.l.b16 %v25
  %v41 = vpack.c.b16 %v40, %v39
  %v46 = vunpack.c.l.b16 %v26
  %v47 = vunpack.c.l.b16 %v27
  %v48 = vunpack.c.l.b16 %v28
  %v49 = vunpack.c.l.b16 %v29
  %v50 = vpack.c.b16 %v47, %v46
  %v51 = vpack.c.b16 %v49, %v48
  %vm54 = vcmask 261120
  %v56 = vsel %vm54, %v41, 0
  %58 = vmatprep.subr.bf16.mxu0 0
  %59 = vmatpush1.bf16.msra.mxu0 0
  %60 = vmatprep.subr.bf16.mxu0 0
  %61 = vmatpush1.bf16.msra.mxu0 0
  %62 = vmatprep.subr.bf16.mxu0 0
  %63 = vmatpush1.bf16.msra.mxu0 0
  %64 = vmatprep.subr.bf16.mxu0 0
  %65 = vmatpush1.bf16.msra.mxu0 0
  %66 = vmatprep.subr.bf16.mxu0 0
  %67 = vmatpush1.bf16.msra.mxu0 0
  %68 = vmatprep.subr.bf16.mxu0 0
  %69 = vmatpush1.bf16.msra.mxu0 0
  %70 = vmatprep.subr.bf16.mxu0 0
  %71 = vmatpush1.bf16.msra.mxu0 %v51
  %72 = vmatprep.subr.bf16.mxu0 0
  %73 = vmatpush1.bf16.msra.mxu0 %v50
  %74 = vmatprep.subr.bf16.mxu0 0
  %75 = vmatpush2.bf16.msra.mxu0 0
  %76 = vmatprep.subr.bf16.mxu0 0
  %77 = vmatpush2.bf16.msra.mxu0 0
  %78 = vmatprep.subr.bf16.mxu0 0
  %79 = vmatpush2.bf16.msra.mxu0 0
  %80 = vmatprep.subr.bf16.mxu0 0
  %81 = vmatpush2.bf16.msra.mxu0 0
  %82 = vmatprep.subr.bf16.mxu0 0
  %83 = vmatpush2.bf16.msra.mxu0 0
  %84 = vmatprep.subr.bf16.mxu0 0
  %85 = vmatpush2.bf16.msra.mxu0 0
  %86 = vmatprep.subr.bf16.mxu0 0
  %87 = vmatpush2.bf16.msra.mxu0 0
  %88 = vmatprep.subr.bf16.mxu0 0
  %89 = vmatpush2.bf16.msra.mxu0 0
  %90 = vmatprep.mubr.bf16.mxu0 0
  %91 = vmatmul.mubr.bf16.gmra.mxu0 %v56
  %v92 = vpop.f32.mrf.mxu0
  %v93 = vadd.f32 %v35, %v92
  %v94 = vpop.f32.mrf.mxu0
  %v95 = vpop.f32.mrf.mxu0
  %v96 = vadd.f32 %v35, %v95
  %v97 = vpop.f32.mrf.mxu0
  %98 = vdwg.mxu0
  %v99 = vld [vmem:[%s1] sm:$0xff]
  %v100 = vld [vmem:[%s1 + $0x8] sm:$0xff]
  %v101 = vadd.f32 %v99, %v93
  %v102 = vadd.f32 %v100, %v96
  %v103 = vsel %vm54, %v101, 0.0
  %104 = vadd.xlane.f32.xlu0 %v103
  %v105 = vpop.xlane.xlu0 %104
  %v106 = vsel %vm54, %v102, 0.0
  %107 = vadd.xlane.f32.xlu0 %v106
  %v108 = vpop.xlane.xlu0 %107
  %v109 = vrcp.pop 32.0
  %v110 = vmul.f32 %v105, %v109
  %v111 = vmul.f32 %v108, %v109
  %v112 = vsub.f32 %v101, %v110
  %v113 = vsub.f32 %v102, %v111
  %v114 = vmul.f32 %v112, %v112
  %v115 = vmul.f32 %v113, %v113
  %v116 = vsel %vm54, %v114, 0.0
  %117 = vadd.xlane.f32.xlu0 %v116
  %v118 = vpop.xlane.xlu0 %117
  %v119 = vsel %vm54, %v115, 0.0
  %120 = vadd.xlane.f32.xlu0 %v119
  %v121 = vpop.xlane.xlu0 %120
  %v122 = vmul.f32 %v118, %v109
  %v123 = vmul.f32 %v121, %v109
  %v124 = vadd.f32 %v122, 1e-05
  %v125 = vadd.f32 %v123, 1e-05
  %v126 = vrsqrt.pop %v124
  %v127 = vrsqrt.pop %v125
  %v128 = vmul.f32 %v112, %v126
  %v129 = vmul.f32 %v113, %v127
  %v130 = vld [vmem:[%s4] sm:$0x1]
  %v132 = vlaneseq
  %v133 = vshrl.u32 %v132, 7
  %v134 = vsub.s32 0, %v133
  %v135 = vrot.slane %v130, %v134
  %v137 = vmul.f32 %v128, %v135
  %v138 = vmul.f32 %v129, %v135
  %v139 = vld [vmem:[%s5] sm:$0x1]
  %v141 = vlaneseq
  %v142 = vshrl.u32 %v141, 7
  %v143 = vsub.s32 0, %v142
  %v144 = vrot.slane %v139, %v143
  %v146 = vadd.f32 %v137, %v144
  %v147 = vadd.f32 %v138, %v144
  %148 = vst.msk [vmem:[%s6] sm:$0xff] %vm54, %v146
  %149 = vst.msk [vmem:[%s6 + $0x8] sm:$0xff] %vm54, %v147
  // Predicated region
  $region26: #{bert_forward.10} parent=0 // pred_check
    _
  $region27: #{bert_forward.10} parent=0 // pred_check_branch
    %151 = sbr.rel (0) target = $region29
  $region28: #{bert_forward.10} parent=0 // pred_region
    _
  $region29: #{bert_forward.10} parent=0 // pred_fallthru
    _
  // Predicated region
  $region30: #{bert_forward.10} parent=0 // pred_check
    _
  $region31: #{bert_forward.10} parent=0 // pred_check_branch
    %153 = sbr.rel (0) target = $region33
  $region32: #{bert_forward.10} parent=0 // pred_region
    _
  $region33: #{bert_forward.10} parent=0 // pred_fallthru
    _

// kernel: bert_forward.9
$region0: #{bert_forward.9}
  #allocation0 [shape = 'u32[]', space=smem, size = 0x4, offset = 0x4, fixed_abs, tag = 'smem constant byte address 0x4 - core index']
  #allocation1 [shape = 'u32[144,128]{1,0:T(1,128)}', space=vmem, size = 0x12000, scoped, tag = 'internal scratch']
  %s0 = inlined_call_operand.vmem [shape: bf16[2,8,96], index: 0, kind: input, shape index: {}]
  %s1 = inlined_call_operand.vmem [shape: bf16[2,8,32], index: 1, kind: output, shape index: {}]
  %s2 = sld [smem:[#allocation0]]
  $region37: #{bert_forward.9} parent=0
    _
  %s4 = ssub.s32 1, %s2
  %s5 = scalar_select 0, %s4, %s2
  loop: start=0, step=1, limit=4
  $region2: #{bert_forward.9} parent=0 // loop_pre_header
    _
  $region3: #{bert_forward.9} parent=0 // loop_header
    %s7 = sphi 0, %s11
    %p8 = scmp.ge.s32.totalorder %s7, 4
    %s17 = sphi 0, %s19
    %s20 = sphi 0, %s17
    %s21 = sphi 0, %s20
    %s37 = sphi 0, %s21
    %s43 = sphi 0, %s45
    %s46 = sphi 0, %s43
    %s47 = sphi 0, %s46
    %s63 = sphi 0, %s47
  $region4: #{bert_forward.9} parent=0 // loop_header_branch
    %10 = sbr.rel (%p8) target = $region8
  $region5: #{bert_forward.9} parent=0 // loop_body
    %s12 = ssub.s32 %s7, 1
    %s13 = ssub.s32 %s7, 2
    %s14 = sadd.s32 %s7, 1
    %s15 = ssub.s32 %s7, %s14
    %p16 = scmp.eq.s32.totalorder %s15, 0
    %s18 = sadd.s32 %s17, 1
    %s19 = scalar_select %p16, %s17, %s18
    %p22 = pneg %p16
    %p23 = scmp.eq.s32.totalorder %s7, 1
    %p24 = por %p22, %p23
    %p25 = scmp.ne.s32.totalorder %s17, %s20
    %p26 = scmp.eq.s32.totalorder %s7, 0
    %p27 = por %p25, %p26
    %p28 = scmp.ne.s32.totalorder %s17, %s20
    %p29 = scmp.eq.s32.totalorder %s12, 1
    %p30 = por %p28, %p29
    %p31 = scmp.ne.s32.totalorder %s20, %s21
    %p32 = scmp.eq.s32.totalorder %s12, 0
    %p33 = por %p31, %p32
    %p34 = scmp.ne.s32.totalorder %s20, %s21
    %p35 = scmp.eq.s32.totalorder %s13, 1
    %p36 = por %p34, %p35
    %p38 = scmp.ne.s32.totalorder %s21, %s37
    %p39 = scmp.eq.s32.totalorder %s13, 0
    %p40 = por %p38, %p39
    %s41 = ssub.s32 %s7, %s14
    %p42 = scmp.eq.s32.totalorder %s41, 0
    %s44 = sadd.s32 %s43, 1
    %s45 = scalar_select %p42, %s43, %s44
    %p48 = pneg %p42
    %p49 = scmp.eq.s32.totalorder %s7, 1
    %p50 = por %p48, %p49
    %p51 = scmp.ne.s32.totalorder %s43, %s46
    %p52 = scmp.eq.s32.totalorder %s7, 0
    %p53 = por %p51, %p52
    %p54 = scmp.ne.s32.totalorder %s43, %s46
    %p55 = scmp.eq.s32.totalorder %s12, 1
    %p56 = por %p54, %p55
    %p57 = scmp.ne.s32.totalorder %s46, %s47
    %p58 = scmp.eq.s32.totalorder %s12, 0
    %p59 = por %p57, %p58
    %p60 = scmp.ne.s32.totalorder %s46, %s47
    %p61 = scmp.eq.s32.totalorder %s13, 1
    %p62 = por %p60, %p61
    %p64 = scmp.ne.s32.totalorder %s47, %s63
    %p65 = scmp.eq.s32.totalorder %s13, 0
    %p66 = por %p64, %p65
    %p67 = scmp.le.s32.totalorder 1, %s7
    %p68 = scmp.lt.s32.totalorder %s7, 3
    %p69 = pnand %p67, %p68
    %p70 = pneg %p69
    // Predicated region
    $region9: #{bert_forward.9} parent=5 // pred_check
      _
    $region10: #{bert_forward.9} parent=5 // pred_check_branch
      %72 = sbr.rel (%p69) target = $region12
    $region11: #{bert_forward.9} parent=5 // pred_region
      %s73 = ssub.s32 %s7, 1
    $region12: #{bert_forward.9} parent=5 // pred_fallthru
      _
    %p74 = scmp.lt.s32.totalorder %s7, 2
    // Predicated region
    $region13: #{bert_forward.9} parent=5 // pred_check
      %p75 = pneg %p74
    $region14: #{bert_forward.9} parent=5 // pred_check_branch
      %77 = sbr.rel (%p75) target = $region16
    $region15: #{bert_forward.9} parent=5 // pred_region
      // Predicated region
      $region17: #{bert_forward.9} parent=15 // pred_check
        %p78 = pneg %p27
      $region18: #{bert_forward.9} parent=15 // pred_check_branch
        %80 = sbr.rel (%p78) target = $region20
      $region19: #{bert_forward.9} parent=15 // pred_region
        %p81 = scmp.lt.s32.totalorder %s7, 1
        %s82 = scalar_select %p81, %s7, 1
        %s83 = smul.addr %s82, 4
        %s84 = scalar_lea.vmem %s0, %s83
      $region20: #{bert_forward.9} parent=15 // pred_fallthru
        _
    $region16: #{bert_forward.9} parent=5 // pred_fallthru
      _
    %p85 = scmp.le.s32.totalorder 1, %s7
    %p86 = scmp.lt.s32.totalorder %s7, 3
    %p87 = pnand %p85, %p86
    %p88 = pneg %p87
    // Predicated region
    $region21: #{bert_forward.9} parent=5 // pred_check
      _
    $region22: #{bert_forward.9} parent=5 // pred_check_branch
      %90 = sbr.rel (%p87) target = $region24
    $region23: #{bert_forward.9} parent=5 // pred_region
      %s91 = ssub.s32 %s7, 1
      %p92 = scmp.lt.s32.totalorder %s12, 1
      %s93 = scalar_select %p92, %s12, 1
      %s94 = smul.addr %s93, 4
      %s95 = scalar_lea.vmem %s0, %s94
      %p96 = pneg %p33
      %p97 = pneg %p30
      %p98 = pneg %p59
      %p99 = pneg %p56
      %p100 = scmp.lt.s32.totalorder %s12, 1
      %s101 = scalar_select %p100, %s12, 1
      %s102 = smul.addr %s101, 4
      %s103 = scalar_lea.vmem %s1, %s102
      %p104 = scmp.lt.s32.totalorder %s12, 1
      %s105 = scalar_select %p104, %s12, 1
      %s106 = smul.addr %s105, 4
      %s107 = scalar_lea.vmem %s0, %s106
      %p108 = scmp.lt.s32.totalorder %s12, 1
      %s109 = scalar_select %p108, %s12, 1
      %s110 = smul.addr %s109, 4
      %s111 = scalar_lea.vmem %s1, %s110
      %v113 = vld [vmem:[%s107] sm:$0xf]
      %v115 = vunpack.c.l.b16 %v113
      %v116 = vpack.c.b16 %v115, %v115
      %117 = vrot.lane.b32.xlu0 %v116, 96
      %v118 = vpop.permute.xlu0 %117
      %vm119 = vcmask 64512
      %v121 = vsel %vm119, %v113, 0
      %v124 = vsel %vm119, %v118, 0
      %126 = vmatprep.subr.bf16.mxu0 0
      %127 = vmatpush1.bf16.xpose.msra.mxu0 0
      %128 = vmatprep.subr.bf16.mxu0 0
      %129 = vmatpush1.bf16.xpose.msra.mxu0 0
      %130 = vmatprep.subr.bf16.mxu0 0
      %131 = vmatpush1.bf16.xpose.msra.mxu0 0
      %132 = vmatprep.subr.bf16.mxu0 0
      %133 = vmatpush1.bf16.xpose.msra.mxu0 0
      %134 = vmatprep.subr.bf16.mxu0 0
      %135 = vmatpush1.bf16.xpose.msra.mxu0 0
      %136 = vmatprep.subr.bf16.mxu0 0
      %137 = vmatpush1.bf16.xpose.msra.mxu0 0
      %138 = vmatprep.subr.bf16.mxu0 0
      %139 = vmatpush1.bf16.xpose.msra.mxu0 0
      %140 = vmatprep.subr.bf16.mxu0 0
      %141 = vmatpush1.bf16.xpose.msra.mxu0 %v124
      %142 = vmatprep.subr.bf16.mxu0 0
      %143 = vmatpush2.bf16.xpose.msra.mxu0 0
      %144 = vmatprep.subr.bf16.mxu0 0
      %145 = vmatpush2.bf16.xpose.msra.mxu0 0
      %146 = vmatprep.subr.bf16.mxu0 0
      %147 = vmatpush2.bf16.xpose.msra.mxu0 0
      %148 = vmatprep.subr.bf16.mxu0 0
      %149 = vmatpush2.bf16.xpose.msra.mxu0 0
      %150 = vmatprep.subr.bf16.mxu0 0
      %151 = vmatpush2.bf16.xpose.msra.mxu0 0
      %152 = vmatprep.subr.bf16.mxu0 0
      %153 = vmatpush2.bf16.xpose.msra.mxu0 0
      %154 = vmatprep.subr.bf16.mxu0 0
      %155 = vmatpush2.bf16.xpose.msra.mxu0 0
      %156 = vmatprep.subr.bf16.mxu0 0
      %157 = vmatpush2.bf16.xpose.msra.mxu0 0
      %158 = vmatprep.mubr.bf16.mxu0 0
      %159 = vmatmul.mubr.bf16.gmra.mxu0 %v121
      %v160 = vpop.f32.mrf.mxu0
      %v161 = vadd.f32 0.0, %v160
      %v162 = vpop.f32.mrf.mxu0
      %v163 = vpop.f32.mrf.mxu0
      %v164 = vpop.f32.mrf.mxu0
      %165 = vdwg.mxu0
      %v166 = vsel %vm119, %v161, -inf
      %167 = vmax.xlane.f32.xlu0 %v166
      %v168 = vpop.xlane.xlu0 %167
      %v169 = vsub.f32 %v161, %v168
      %v170 = vmul.f32 %v169, 1.442695
      %v171 = vpow.pop %v170
      %v172 = vsel %vm119, %v171, 0.0
      %173 = vadd.xlane.f32.xlu0 %v172
      %v174 = vpop.xlane.xlu0 %173
      %v175 = vrcp.pop %v174
      %v176 = vmul.f32 %v171, %v175
      %v177 = vpack.c.bf16 %v176, %v176
      %178 = vrot.lane.b32.xlu0 %v116, 64
      %v179 = vpop.permute.xlu0 %178
      %v181 = vsel %vm119, %v177, 0
      %vm183 = vcmask 1043456
      %v185 = vsel %vm183, %v179, 0
      %187 = vmatprep.subr.bf16.mxu0 0
      %188 = vmatpush1.bf16.msra.mxu0 0
      %189 = vmatprep.subr.bf16.mxu0 0
      %190 = vmatpush1.bf16.msra.mxu0 0
      %191 = vmatprep.subr.bf16.mxu0 0
      %192 = vmatpush1.bf16.msra.mxu0 0
      %193 = vmatprep.subr.bf16.mxu0 0
      %194 = vmatpush1.bf16.msra.mxu0 0
      %195 = vmatprep.subr.bf16.mxu0 0
      %196 = vmatpush1.bf16.msra.mxu0 0
      %197 = vmatprep.subr.bf16.mxu0 0
      %198 = vmatpush1.bf16.msra.mxu0 0
      %199 = vmatprep.subr.bf16.mxu0 0
      %200 = vmatpush1.bf16.msra.mxu0 0
      %201 = vmatprep.subr.bf16.mxu0 0
      %202 = vmatpush1.bf16.msra.mxu0 %v185
      %203 = vmatprep.subr.bf16.mxu0 0
      %204 = vmatpush2.bf16.msra.mxu0 0
      %205 = vmatprep.subr.bf16.mxu0 0
      %206 = vmatpush2.bf16.msra.mxu0 0
      %207 = vmatprep.subr.bf16.mxu0 0
      %208 = vmatpush2.bf16.msra.mxu0 0
      %209 = vmatprep.subr.bf16.mxu0 0
      %210 = vmatpush2.bf16.msra.mxu0 0
      %211 = vmatprep.subr.bf16.mxu0 0
      %212 = vmatpush2.bf16.msra.mxu0 0
      %213 = vmatprep.subr.bf16.mxu0 0
      %214 = vmatpush2.bf16.msra.mxu0 0
      %215 = vmatprep.subr.bf16.mxu0 0
      %216 = vmatpush2.bf16.msra.mxu0 0
      %217 = vmatprep.subr.bf16.mxu0 0
      %218 = vmatpush2.bf16.msra.mxu0 0
      %219 = vmatprep.mubr.bf16.mxu0 0
      %220 = vmatmul.mubr.bf16.gmra.mxu0 %v181
      %v221 = vpop.f32.mrf.mxu0
      %v222 = vadd.f32 0.0, %v221
      %v223 = vpop.f32.mrf.mxu0
      %v224 = vpop.f32.mrf.mxu0
      %v225 = vpop.f32.mrf.mxu0
      %226 = vdwg.mxu0
      %227 = vrot.lane.b32.xlu0 %v116, 120
      %v228 = vpop.permute.xlu0 %227
      %229 = vrot.lane.b32.xlu0 %v116, 88
      %v230 = vpop.permute.xlu0 %229
      %v232 = vsel %vm119, %v228, 0
      %v235 = vsel %vm119, %v230, 0
      %237 = vmatprep.subr.bf16.mxu0 0
      %238 = vmatpush1.bf16.xpose.msra.mxu0 0
      %239 = vmatprep.subr.bf16.mxu0 0
      %240 = vmatpush1.bf16.xpose.msra.mxu0 0
      %241 = vmatprep.subr.bf16.mxu0 0
      %242 = vmatpush1.bf16.xpose.msra.mxu0 0
      %243 = vmatprep.subr.bf16.mxu0 0
      %244 = vmatpush1.bf16.xpose.msra.mxu0 0
      %245 = vmatprep.subr.bf16.mxu0 0
      %246 = vmatpush1.bf16.xpose.msra.mxu0 0
      %247 = vmatprep.subr.bf16.mxu0 0
      %248 = vmatpush1.bf16.xpose.msra.mxu0 0
      %249 = vmatprep.subr.bf16.mxu0 0
      %250 = vmatpush1.bf16.xpose.msra.mxu0 0
      %251 = vmatprep.subr.bf16.mxu0 0
      %252 = vmatpush1.bf16.xpose.msra.mxu0 %v235
      %253 = vmatprep.subr.bf16.mxu0 0
      %254 = vmatpush2.bf16.xpose.msra.mxu0 0
      %255 = vmatprep.subr.bf16.mxu0 0
      %256 = vmatpush2.bf16.xpose.msra.mxu0 0
      %257 = vmatprep.subr.bf16.mxu0 0
      %258 = vmatpush2.bf16.xpose.msra.mxu0 0
      %259 = vmatprep.subr.bf16.mxu0 0
      %260 = vmatpush2.bf16.xpose.msra.mxu0 0
      %261 = vmatprep.subr.bf16.mxu0 0
      %262 = vmatpush2.bf16.xpose.msra.mxu0 0
      %263 = vmatprep.subr.bf16.mxu0 0
      %264 = vmatpush2.bf16.xpose.msra.mxu0 0
      %265 = vmatprep.subr.bf16.mxu0 0
      %266 = vmatpush2.bf16.xpose.msra.mxu0 0
      %267 = vmatprep.subr.bf16.mxu0 0
      %268 = vmatpush2.bf16.xpose.msra.mxu0 0
      %269 = vmatprep.mubr.bf16.mxu0 0
      %270 = vmatmul.mubr.bf16.gmra.mxu0 %v232
      %v271 = vpop.f32.mrf.mxu0
      %v272 = vadd.f32 0.0, %v271
      %v273 = vpop.f32.mrf.mxu0
      %v274 = vpop.f32.mrf.mxu0
      %v275 = vpop.f32.mrf.mxu0
      %276 = vdwg.mxu0
      %v277 = vsel %vm119, %v272, -inf
      %278 = vmax.xlane.f32.xlu0 %v277
      %v279 = vpop.xlane.xlu0 %278
      %v280 = vsub.f32 %v272, %v279
      %v281 = vmul.f32 %v280, 1.442695
      %v282 = vpow.pop %v281
      %v283 = vsel %vm119, %v282, 0.0
      %284 = vadd.xlane.f32.xlu0 %v283
      %v285 = vpop.xlane.xlu0 %284
      %v286 = vrcp.pop %v285
      %v287 = vmul.f32 %v282, %v286
      %v288 = vpack.c.bf16 %v287, %v287
      %289 = vrot.lane.b32.xlu0 %v116, 56
      %v290 = vpop.permute.xlu0 %289
      %v292 = vsel %vm119, %v288, 0
      %v295 = vsel %vm183, %v290, 0
      %297 = vmatprep.subr.bf16.mxu0 0
      %298 = vmatpush1.bf16.msra.mxu0 0
      %299 = vmatprep.subr.bf16.mxu0 0
      %300 = vmatpush1.bf16.msra.mxu0 0
      %301 = vmatprep.subr.bf16.mxu0 0
      %302 = vmatpush1.bf16.msra.mxu0 0
      %303 = vmatprep.subr.bf16.mxu0 0
      %304 = vmatpush1.bf16.msra.mxu0 0
      %305 = vmatprep.subr.bf16.mxu0 0
      %306 = vmatpush1.bf16.msra.mxu0 0
      %307 = vmatprep.subr.bf16.mxu0 0
      %308 = vmatpush1.bf16.msra.mxu0 0
      %309 = vmatprep.subr.bf16.mxu0 0
      %310 = vmatpush1.bf16.msra.mxu0 0
      %311 = vmatprep.subr.bf16.mxu0 0
      %312 = vmatpush1.bf16.msra.mxu0 %v295
      %313 = vmatprep.subr.bf16.mxu0 0
      %314 = vmatpush2.bf16.msra.mxu0 0
      %315 = vmatprep.subr.bf16.mxu0 0
      %316 = vmatpush2.bf16.msra.mxu0 0
      %317 = vmatprep.subr.bf16.mxu0 0
      %318 = vmatpush2.bf16.msra.mxu0 0
      %319 = vmatprep.subr.bf16.mxu0 0
      %320 = vmatpush2.bf16.msra.mxu0 0
      %321 = vmatprep.subr.bf16.mxu0 0
      %322 = vmatpush2.bf16.msra.mxu0 0
      %323 = vmatprep.subr.bf16.mxu0 0
      %324 = vmatpush2.bf16.msra.mxu0 0
      %325 = vmatprep.subr.bf16.mxu0 0
      %326 = vmatpush2.bf16.msra.mxu0 0
      %327 = vmatprep.subr.bf16.mxu0 0
      %328 = vmatpush2.bf16.msra.mxu0 0
      %329 = vmatprep.mubr.bf16.mxu0 0
      %330 = vmatmul.mubr.bf16.gmra.mxu0 %v292
      %v331 = vpop.f32.mrf.mxu0
      %v332 = vadd.f32 0.0, %v331
      %v333 = vpop.f32.mrf.mxu0
      %v334 = vpop.f32.mrf.mxu0
      %v335 = vpop.f32.mrf.mxu0
      %336 = vdwg.mxu0
      %337 = vrot.lane.b32.xlu0 %v116, 112
      %v338 = vpop.permute.xlu0 %337
      %339 = vrot.lane.b32.xlu0 %v116, 80
      %v340 = vpop.permute.xlu0 %339
      %v342 = vsel %vm119, %v338, 0
      %v345 = vsel %vm119, %v340, 0
      %347 = vmatprep.subr.bf16.mxu0 0
      %348 = vmatpush1.bf16.xpose.msra.mxu0 0
      %349 = vmatprep.subr.bf16.mxu0 0
      %350 = vmatpush1.bf16.xpose.msra.mxu0 0
      %351 = vmatprep.subr.bf16.mxu0 0
      %352 = vmatpush1.bf16.xpose.msra.mxu0 0
      %353 = vmatprep.subr.bf16.mxu0 0
      %354 = vmatpush1.bf16.xpose.msra.mxu0 0
      %355 = vmatprep.subr.bf16.mxu0 0
      %356 = vmatpush1.bf16.xpose.msra.mxu0 0
      %357 = vmatprep.subr.bf16.mxu0 0
      %358 = vmatpush1.bf16.xpose.msra.mxu0 0
      %359 = vmatprep.subr.bf16.mxu0 0
      %360 = vmatpush1.bf16.xpose.msra.mxu0 0
      %361 = vmatprep.subr.bf16.mxu0 0
      %362 = vmatpush1.bf16.xpose.msra.mxu0 %v345
      %363 = vmatprep.subr.bf16.mxu0 0
      %364 = vmatpush2.bf16.xpose.msra.mxu0 0
      %365 = vmatprep.subr.bf16.mxu0 0
      %366 = vmatpush2.bf16.xpose.msra.mxu0 0
      %367 = vmatprep.subr.bf16.mxu0 0
      %368 = vmatpush2.bf16.xpose.msra.mxu0 0
      %369 = vmatprep.subr.bf16.mxu0 0
      %370 = vmatpush2.bf16.xpose.msra.mxu0 0
      %371 = vmatprep.subr.bf16.mxu0 0
      %372 = vmatpush2.bf16.xpose.msra.mxu0 0
      %373 = vmatprep.subr.bf16.mxu0 0
      %374 = vmatpush2.bf16.xpose.msra.mxu0 0
      %375 = vmatprep.subr.bf16.mxu0 0
      %376 = vmatpush2.bf16.xpose.msra.mxu0 0
      %377 = vmatprep.subr.bf16.mxu0 0
      %378 = vmatpush2.bf16.xpose.msra.mxu0 0
      %379 = vmatprep.mubr.bf16.mxu0 0
      %380 = vmatmul.mubr.bf16.gmra.mxu0 %v342
      %v381 = vpop.f32.mrf.mxu0
      %v382 = vadd.f32 0.0, %v381
      %v383 = vpop.f32.mrf.mxu0
      %v384 = vpop.f32.mrf.mxu0
      %v385 = vpop.f32.mrf.mxu0
      %386 = vdwg.mxu0
      %v387 = vsel %vm119, %v382, -inf
      %388 = vmax.xlane.f32.xlu0 %v387
      %v389 = vpop.xlane.xlu0 %388
      %v390 = vsub.f32 %v382, %v389
      %v391 = vmul.f32 %v390, 1.442695
      %v392 = vpow.pop %v391
      %v393 = vsel %vm119, %v392, 0.0
      %394 = vadd.xlane.f32.xlu0 %v393
      %v395 = vpop.xlane.xlu0 %394
      %v396 = vrcp.pop %v395
      %v397 = vmul.f32 %v392, %v396
      %v398 = vpack.c.bf16 %v397, %v397
      %399 = vrot.lane.b32.xlu0 %v116, 48
      %v400 = vpop.permute.xlu0 %399
      %v402 = vsel %vm119, %v398, 0
      %v405 = vsel %vm183, %v400, 0
      %407 = vmatprep.subr.bf16.mxu0 0
      %408 = vmatpush1.bf16.msra.mxu0 0
      %409 = vmatprep.subr.bf16.mxu0 0
      %410 = vmatpush1.bf16.msra.mxu0 0
      %411 = vmatprep.subr.bf16.mxu0 0
      %412 = vmatpush1.bf16.msra.mxu0 0
      %413 = vmatprep.subr.bf16.mxu0 0
      %414 = vmatpush1.bf16.msra.mxu0 0
      %415 = vmatprep.subr.bf16.mxu0 0
      %416 = vmatpush1.bf16.msra.mxu0 0
      %417 = vmatprep.subr.bf16.mxu0 0
      %418 = vmatpush1.bf16.msra.mxu0 0
      %419 = vmatprep.subr.bf16.mxu0 0
      %420 = vmatpush1.bf16.msra.mxu0 0
      %421 = vmatprep.subr.bf16.mxu0 0
      %422 = vmatpush1.bf16.msra.mxu0 %v405
      %423 = vmatprep.subr.bf16.mxu0 0
      %424 = vmatpush2.bf16.msra.mxu0 0
      %425 = vmatprep.subr.bf16.mxu0 0
      %426 = vmatpush2.bf16.msra.mxu0 0
      %427 = vmatprep.subr.bf16.mxu0 0
      %428 = vmatpush2.bf16.msra.mxu0 0
      %429 = vmatprep.subr.bf16.mxu0 0
      %430 = vmatpush2.bf16.msra.mxu0 0
      %431 = vmatprep.subr.bf16.mxu0 0
      %432 = vmatpush2.bf16.msra.mxu0 0
      %433 = vmatprep.subr.bf16.mxu0 0
      %434 = vmatpush2.bf16.msra.mxu0 0
      %435 = vmatprep.subr.bf16.mxu0 0
      %436 = vmatpush2.bf16.msra.mxu0 0
      %437 = vmatprep.subr.bf16.mxu0 0
      %438 = vmatpush2.bf16.msra.mxu0 0
      %439 = vmatprep.mubr.bf16.mxu0 0
      %440 = vmatmul.mubr.bf16.gmra.mxu0 %v402
      %v441 = vpop.f32.mrf.mxu0
      %v442 = vadd.f32 0.0, %v441
      %v443 = vpop.f32.mrf.mxu0
      %v444 = vpop.f32.mrf.mxu0
      %v445 = vpop.f32.mrf.mxu0
      %446 = vdwg.mxu0
      %447 = vrot.lane.b32.xlu0 %v116, 104
      %v448 = vpop.permute.xlu0 %447
      %449 = vrot.lane.b32.xlu0 %v116, 72
      %v450 = vpop.permute.xlu0 %449
      %v452 = vsel %vm119, %v448, 0
      %v455 = vsel %vm119, %v450, 0
      %457 = vmatprep.subr.bf16.mxu0 0
      %458 = vmatpush1.bf16.xpose.msra.mxu0 0
      %459 = vmatprep.subr.bf16.mxu0 0
      %460 = vmatpush1.bf16.xpose.msra.mxu0 0
      %461 = vmatprep.subr.bf16.mxu0 0
      %462 = vmatpush1.bf16.xpose.msra.mxu0 0
      %463 = vmatprep.subr.bf16.mxu0 0
      %464 = vmatpush1.bf16.xpose.msra.mxu0 0
      %465 = vmatprep.subr.bf16.mxu0 0
      %466 = vmatpush1.bf16.xpose.msra.mxu0 0
      %467 = vmatprep.subr.bf16.mxu0 0
      %468 = vmatpush1.bf16.xpose.msra.mxu0 0
      %469 = vmatprep.subr.bf16.mxu0 0
      %470 = vmatpush1.bf16.xpose.msra.mxu0 0
      %471 = vmatprep.subr.bf16.mxu0 0
      %472 = vmatpush1.bf16.xpose.msra.mxu0 %v455
      %473 = vmatprep.subr.bf16.mxu0 0
      %474 = vmatpush2.bf16.xpose.msra.mxu0 0
      %475 = vmatprep.subr.bf16.mxu0 0
      %476 = vmatpush2.bf16.xpose.msra.mxu0 0
      %477 = vmatprep.subr.bf16.mxu0 0
      %478 = vmatpush2.bf16.xpose.msra.mxu0 0
      %479 = vmatprep.subr.bf16.mxu0 0
      %480 = vmatpush2.bf16.xpose.msra.mxu0 0
      %481 = vmatprep.subr.bf16.mxu0 0
      %482 = vmatpush2.bf16.xpose.msra.mxu0 0
      %483 = vmatprep.subr.bf16.mxu0 0
      %484 = vmatpush2.bf16.xpose.msra.mxu0 0
      %485 = vmatprep.subr.bf16.mxu0 0
      %486 = vmatpush2.bf16.xpose.msra.mxu0 0
      %487 = vmatprep.subr.bf16.mxu0 0
      %488 = vmatpush2.bf16.xpose.msra.mxu0 0
      %489 = vmatprep.mubr.bf16.mxu0 0
      %490 = vmatmul.mubr.bf16.gmra.mxu0 %v452
      %v491 = vpop.f32.mrf.mxu0
      %v492 = vadd.f32 0.0, %v491
      %v493 = vpop.f32.mrf.mxu0
      %v494 = vpop.f32.mrf.mxu0
      %v495 = vpop.f32.mrf.mxu0
      %496 = vdwg.mxu0
      %v497 = vsel %vm119, %v492, -inf
      %498 = vmax.xlane.f32.xlu0 %v497
      %v499 = vpop.xlane.xlu0 %498
      %v500 = vsub.f32 %v492, %v499
      %v501 = vmul.f32 %v500, 1.442695
      %v502 = vpow.pop %v501
      %v503 = vsel %vm119, %v502, 0.0
      %504 = vadd.xlane.f32.xlu0 %v503
      %v505 = vpop.xlane.xlu0 %504
      %v506 = vrcp.pop %v505
      %v507 = vmul.f32 %v502, %v506
      %v508 = vpack.c.bf16 %v507, %v507
      %509 = vrot.lane.b32.xlu0 %v116, 40
      %v510 = vpop.permute.xlu0 %509
      %v512 = vsel %vm119, %v508, 0
      %v515 = vsel %vm183, %v510, 0
      %517 = vmatprep.subr.bf16.mxu0 0
      %518 = vmatpush1.bf16.msra.mxu0 0
      %519 = vmatprep.subr.bf16.mxu0 0
      %520 = vmatpush1.bf16.msra.mxu0 0
      %521 = vmatprep.subr.bf16.mxu0 0
      %522 = vmatpush1.bf16.msra.mxu0 0
      %523 = vmatprep.subr.bf16.mxu0 0
      %524 = vmatpush1.bf16.msra.mxu0 0
      %525 = vmatprep.subr.bf16.mxu0 0
      %526 = vmatpush1.bf16.msra.mxu0 0
      %527 = vmatprep.subr.bf16.mxu0 0
      %528 = vmatpush1.bf16.msra.mxu0 0
      %529 = vmatprep.subr.bf16.mxu0 0
      %530 = vmatpush1.bf16.msra.mxu0 0
      %531 = vmatprep.subr.bf16.mxu0 0
      %532 = vmatpush1.bf16.msra.mxu0 %v515
      %533 = vmatprep.subr.bf16.mxu0 0
      %534 = vmatpush2.bf16.msra.mxu0 0
      %535 = vmatprep.subr.bf16.mxu0 0
      %536 = vmatpush2.bf16.msra.mxu0 0
      %537 = vmatprep.subr.bf16.mxu0 0
      %538 = vmatpush2.bf16.msra.mxu0 0
      %539 = vmatprep.subr.bf16.mxu0 0
      %540 = vmatpush2.bf16.msra.mxu0 0
      %541 = vmatprep.subr.bf16.mxu0 0
      %542 = vmatpush2.bf16.msra.mxu0 0
      %543 = vmatprep.subr.bf16.mxu0 0
      %544 = vmatpush2.bf16.msra.mxu0 0
      %545 = vmatprep.subr.bf16.mxu0 0
      %546 = vmatpush2.bf16.msra.mxu0 0
      %547 = vmatprep.subr.bf16.mxu0 0
      %548 = vmatpush2.bf16.msra.mxu0 0
      %549 = vmatprep.mubr.bf16.mxu0 0
      %550 = vmatmul.mubr.bf16.gmra.mxu0 %v512
      %v551 = vpop.f32.mrf.mxu0
      %v552 = vadd.f32 0.0, %v551
      %v553 = vpop.f32.mrf.mxu0
      %v554 = vpop.f32.mrf.mxu0
      %v555 = vpop.f32.mrf.mxu0
      %556 = vdwg.mxu0
      %558 = vrot.lane.b32.xlu0 %v332, 8
      %v559 = vpop.permute.xlu0 %558
      %562 = vrot.lane.b32.xlu0 %v442, 16
      %v563 = vpop.permute.xlu0 %562
      %566 = vrot.lane.b32.xlu0 %v552, 24
      %v567 = vpop.permute.xlu0 %566
      %v569 = vsel %vm119, %v222, %v559
      %vm570 = vcmask 130048
      %v571 = vsel %vm570, %v569, %v563
      %vm572 = vcmask 195584
      %v573 = vsel %vm572, %v571, %v567
      %v574 = vpack.c.bf16 %v573, %v573
      %vm575 = vcmask 257024
      %576 = vst.msk [vmem:[%s111] sm:$0xf] %vm575, %v574
      %p577 = scmp.lt.s32.totalorder %s12, 1
      %s578 = scalar_select %p577, %s12, 1
      %s579 = smul.addr %s578, 4
      %s580 = scalar_lea.vmem %s1, %s579
      // Predicated region
      $region25: #{bert_forward.9} parent=23 // pred_check
        %p581 = pneg %p56
      $region26: #{bert_forward.9} parent=23 // pred_check_branch
        %583 = sbr.rel (%p581) target = $region28
      $region27: #{bert_forward.9} parent=23 // pred_region
        _
      $region28: #{bert_forward.9} parent=23 // pred_fallthru
        _
    $region24: #{bert_forward.9} parent=5 // pred_fallthru
      _
    %p584 = scmp.le.s32.totalorder 2, %s7
    // Predicated region
    $region29: #{bert_forward.9} parent=5 // pred_check
      %p585 = pneg %p584
    $region30: #{bert_forward.9} parent=5 // pred_check_branch
      %587 = sbr.rel (%p585) target = $region32
    $region31: #{bert_forward.9} parent=5 // pred_region
      %s588 = ssub.s32 %s7, 2
      // Predicated region
      $region33: #{bert_forward.9} parent=31 // pred_check
        %p589 = pneg %p62
      $region34: #{bert_forward.9} parent=31 // pred_check_branch
        %591 = sbr.rel (%p589) target = $region36
      $region35: #{bert_forward.9} parent=31 // pred_region
        %p592 = scmp.lt.s32.totalorder %s13, 1
        %s593 = scalar_select %p592, %s13, 1
        %s594 = smul.addr %s593, 4
        %s595 = scalar_lea.vmem %s1, %s594
      $region36: #{bert_forward.9} parent=31 // pred_fallthru
        _
    $region32: #{bert_forward.9} parent=5 // pred_fallthru
      _
  $region6: #{bert_forward.9} parent=0 // loop_footer
    %s11 = sadd.s32 1, %s7
  $region7: #{bert_forward.9} parent=0 // loop_footer_branch
    %6 = sbr.rel target = $region3
  $region8: #{bert_forward.9} parent=0 // loop_exit
    _

// kernel: bert_forward.15
$region0: #{bert_forward.15}
  #allocation0 [shape = 'u32[]', space=smem, size = 0x4, offset = 0x4, fixed_abs, tag = 'smem constant byte address 0x4 - core index']
  #allocation1 [shape = 'u32[144,128]{1,0:T(1,128)}', space=vmem, size = 0x12000, scoped, tag = 'internal scratch']
  %s0 = inlined_call_operand.vmem [shape: f32[16,32], index: 0, kind: input, shape index: {}]
  %s1 = inlined_call_operand.vmem [shape: bf16[32,64], index: 1, kind: input, shape index: {}]
  %s2 = inlined_call_operand.vmem [shape: f32[1,64], index: 2, kind: input, shape index: {}]
  %s3 = inlined_call_operand.vmem [shape: bf16[64,32], index: 3, kind: input, shape index: {}]
  %s4 = inlined_call_operand.vmem [shape: f32[1,32], index: 4, kind: input, shape index: {}]
  %s5 = inlined_call_operand.vmem [shape: f32[1,32], index: 5, kind: input, shape index: {}]
  %s6 = inlined_call_operand.vmem [shape: f32[1,32], index: 6, kind: input, shape index: {}]
  %s7 = inlined_call_operand.hbm [shape: f32[16,32], index: 7, kind: output, shape index: {}]
  %s8 = sld [smem:[#allocation0]]
  $region38: #{bert_forward.15} parent=0
    _
  %s10 = ssub.s32 1, %s8
  %s11 = scalar_select 0, %s10, %s8
  $region1: #{bert_forward.15} parent=0
    #allocation2 [shape = 'u8[8192]{0}', space=vmem, size = 0x2000, scoped, tag = 'output window, operand 0, single buffered']
    #allocation3 [shape = 's32[1]{0}', space=sflag, size = 0x4, scoped, tag = 'scoped memory for bert_forward.15']
    %12 = vsyncpa [#allocation3], 0
    // Predicated region
    $region2: #{bert_forward.15} parent=1 // pred_check
      _
    $region3: #{bert_forward.15} parent=1 // pred_check_branch
      %14 = sbr.rel (0) target = $region5
    $region4: #{bert_forward.15} parent=1 // pred_region
      _
    $region5: #{bert_forward.15} parent=1 // pred_fallthru
      _
    // Predicated region
    $region6: #{bert_forward.15} parent=1 // pred_check
      _
    $region7: #{bert_forward.15} parent=1 // pred_check_branch
      %16 = sbr.rel (0) target = $region9
    $region8: #{bert_forward.15} parent=1 // pred_region
      _
    $region9: #{bert_forward.15} parent=1 // pred_fallthru
      _
    // Predicated region
    $region10: #{bert_forward.15} parent=1 // pred_check
      _
    $region11: #{bert_forward.15} parent=1 // pred_check_branch
      %18 = sbr.rel (0) target = $region13
    $region12: #{bert_forward.15} parent=1 // pred_region
      _
    $region13: #{bert_forward.15} parent=1 // pred_fallthru
      _
    // Predicated region
    $region14: #{bert_forward.15} parent=1 // pred_check
      _
    $region15: #{bert_forward.15} parent=1 // pred_check_branch
      %20 = sbr.rel (0) target = $region17
    $region16: #{bert_forward.15} parent=1 // pred_region
      _
    $region17: #{bert_forward.15} parent=1 // pred_fallthru
      _
    // Predicated region
    $region18: #{bert_forward.15} parent=1 // pred_check
      _
    $region19: #{bert_forward.15} parent=1 // pred_check_branch
      %22 = sbr.rel (0) target = $region21
    $region20: #{bert_forward.15} parent=1 // pred_region
      _
    $region21: #{bert_forward.15} parent=1 // pred_fallthru
      _
    // Predicated region
    $region22: #{bert_forward.15} parent=1 // pred_check
      _
    $region23: #{bert_forward.15} parent=1 // pred_check_branch
      %24 = sbr.rel (0) target = $region25
    $region24: #{bert_forward.15} parent=1 // pred_region
      _
    $region25: #{bert_forward.15} parent=1 // pred_fallthru
      _
    // Predicated region
    $region26: #{bert_forward.15} parent=1 // pred_check
      _
    $region27: #{bert_forward.15} parent=1 // pred_check_branch
      %26 = sbr.rel (0) target = $region29
    $region28: #{bert_forward.15} parent=1 // pred_region
      _
    $region29: #{bert_forward.15} parent=1 // pred_fallthru
      _
    %v28 = vld [vmem:[%s0] sm:$0xff]
    %v29 = vld [vmem:[%s0 + $0x8] sm:$0xff]
    %v30 = vpack.c.bf16 %v29, %v28
    %v31 = vld [vmem:[%s1] sm:$0xf]
    %v32 = vld [vmem:[%s1 + $0x4] sm:$0xf]
    %v33 = vld [vmem:[%s1 + $0x8] sm:$0xf]
    %v34 = vld [vmem:[%s1 + $0xc] sm:$0xf]
    %v35 = vld [vmem:[%s2] sm:$0x1]
    %v37 = vlaneseq
    %v38 = vshrl.u32 %v37, 7
    %v39 = vsub.s32 0, %v38
    %v40 = vrot.slane %v35, %v39
    %v46 = vunpack.c.l.b16 %v31
    %v47 = vunpack.c.l.b16 %v32
    %v48 = vunpack.c.l.b16 %v33
    %v49 = vunpack.c.l.b16 %v34
    %v50 = vpack.c.b16 %v47, %v46
    %v51 = vpack.c.b16 %v49, %v48
    %vm54 = vcmask 261120
    %v56 = vsel %vm54, %v30, 0
    %58 = vmatprep.subr.bf16.mxu0 0
    %59 = vmatpush1.bf16.msra.mxu0 0
    %60 = vmatprep.subr.bf16.mxu0 0
    %61 = vmatpush1.bf16.msra.mxu0 0
    %62 = vmatprep.subr.bf16.mxu0 0
    %63 = vmatpush1.bf16.msra.mxu0 0
    %64 = vmatprep.subr.bf16.mxu0 0
    %65 = vmatpush1.bf16.msra.mxu0 0
    %66 = vmatprep.subr.bf16.mxu0 0
    %67 = vmatpush1.bf16.msra.mxu0 0
    %68 = vmatprep.subr.bf16.mxu0 0
    %69 = vmatpush1.bf16.msra.mxu0 0
    %70 = vmatprep.subr.bf16.mxu0 0
    %71 = vmatpush1.bf16.msra.mxu0 %v51
    %72 = vmatprep.subr.bf16.mxu0 0
    %73 = vmatpush1.bf16.msra.mxu0 %v50
    %74 = vmatprep.subr.bf16.mxu0 0
    %75 = vmatpush2.bf16.msra.mxu0 0
    %76 = vmatprep.subr.bf16.mxu0 0
    %77 = vmatpush2.bf16.msra.mxu0 0
    %78 = vmatprep.subr.bf16.mxu0 0
    %79 = vmatpush2.bf16.msra.mxu0 0
    %80 = vmatprep.subr.bf16.mxu0 0
    %81 = vmatpush2.bf16.msra.mxu0 0
    %82 = vmatprep.subr.bf16.mxu0 0
    %83 = vmatpush2.bf16.msra.mxu0 0
    %84 = vmatprep.subr.bf16.mxu0 0
    %85 = vmatpush2.bf16.msra.mxu0 0
    %86 = vmatprep.subr.bf16.mxu0 0
    %87 = vmatpush2.bf16.msra.mxu0 0
    %88 = vmatprep.subr.bf16.mxu0 0
    %89 = vmatpush2.bf16.msra.mxu0 0
    %90 = vmatprep.mubr.bf16.mxu0 0
    %91 = vmatmul.mubr.bf16.gmra.mxu0 %v56
    %v92 = vpop.f32.mrf.mxu0
    %v93 = vadd.f32 %v40, %v92
    %v94 = vpop.f32.mrf.mxu0
    %v95 = vpop.f32.mrf.mxu0
    %v96 = vadd.f32 %v40, %v95
    %v97 = vpop.f32.mrf.mxu0
    %98 = vdwg.mxu0
    %v99 = vmax.f32 %v93, 0.0
    %v100 = vmax.f32 %v96, 0.0
    %v101 = vpack.c.bf16 %v100, %v99
    %v102 = vld [vmem:[%s3] sm:$0xf]
    %v103 = vld [vmem:[%s3 + $0x4] sm:$0xf]
    %v104 = vld [vmem:[%s3 + $0x8] sm:$0xf]
    %v105 = vld [vmem:[%s3 + $0xc] sm:$0xf]
    %v106 = vld [vmem:[%s3 + $0x10] sm:$0xf]
    %v107 = vld [vmem:[%s3 + $0x14] sm:$0xf]
    %v108 = vld [vmem:[%s3 + $0x18] sm:$0xf]
    %v109 = vld [vmem:[%s3 + $0x1c] sm:$0xf]
    %v110 = vld [vmem:[%s4] sm:$0x1]
    %v112 = vlaneseq
    %v113 = vshrl.u32 %v112, 7
    %v114 = vsub.s32 0, %v113
    %v115 = vrot.slane %v110, %v114
    %v125 = vunpack.c.l.b16 %v102
    %v126 = vunpack.c.l.b16 %v103
    %v127 = vunpack.c.l.b16 %v104
    %v128 = vunpack.c.l.b16 %v105
    %v129 = vunpack.c.l.b16 %v106
    %v130 = vunpack.c.l.b16 %v107
    %v131 = vunpack.c.l.b16 %v108
    %v132 = vunpack.c.l.b16 %v109
    %v133 = vpack.c.b16 %v126, %v125
    %v134 = vpack.c.b16 %v128, %v127
    %v135 = vpack.c.b16 %v130, %v129
    %v136 = vpack.c.b16 %v132, %v131
    %vm141 = vcmask 523264
    %v143 = vsel %vm141, %v101, 0
    %145 = vmatprep.subr.bf16.mxu0 0
    %146 = vmatpush1.bf16.msra.mxu0 0
    %147 = vmatprep.subr.bf16.mxu0 0
    %148 = vmatpush1.bf16.msra.mxu0 0
    %149 = vmatprep.subr.bf16.mxu0 0
    %150 = vmatpush1.bf16.msra.mxu0 0
    %151 = vmatprep.subr.bf16.mxu0 0
    %152 = vmatpush1.bf16.msra.mxu0 0
    %153 = vmatprep.subr.bf16.mxu0 0
    %154 = vmatpush1.bf16.msra.mxu0 %v136
    %155 = vmatprep.subr.bf16.mxu0 0
    %156 = vmatpush1.bf16.msra.mxu0 %v135
    %157 = vmatprep.subr.bf16.mxu0 0
    %158 = vmatpush1.bf16.msra.mxu0 %v134
    %159 = vmatprep.subr.bf16.mxu0 0
    %160 = vmatpush1.bf16.msra.mxu0 %v133
    %161 = vmatprep.subr.bf16.mxu0 0
    %162 = vmatpush2.bf16.msra.mxu0 0
    %163 = vmatprep.subr.bf16.mxu0 0
    %164 = vmatpush2.bf16.msra.mxu0 0
    %165 = vmatprep.subr.bf16.mxu0 0
    %166 = vmatpush2.bf16.msra.mxu0 0
    %167 = vmatprep.subr.bf16.mxu0 0
    %168 = vmatpush2.bf16.msra.mxu0 0
    %169 = vmatprep.subr.bf16.mxu0 0
    %170 = vmatpush2.bf16.msra.mxu0 0
    %171 = vmatprep.subr.bf16.mxu0 0
    %172 = vmatpush2.bf16.msra.mxu0 0
    %173 = vmatprep.subr.bf16.mxu0 0
    %174 = vmatpush2.bf16.msra.mxu0 0
    %175 = vmatprep.subr.bf16.mxu0 0
    %176 = vmatpush2.bf16.msra.mxu0 0
    %177 = vmatprep.mubr.bf16.mxu0 0
    %178 = vmatmul.mubr.bf16.gmra.mxu0 %v143
    %v179 = vpop.f32.mrf.mxu0
    %v180 = vadd.f32 %v115, %v179
    %v181 = vpop.f32.mrf.mxu0
    %v182 = vpop.f32.mrf.mxu0
    %v183 = vadd.f32 %v115, %v182
    %v184 = vpop.f32.mrf.mxu0
    %185 = vdwg.mxu0
    %v186 = vadd.f32 %v28, %v180
    %v187 = vadd.f32 %v29, %v183
    %v188 = vsel %vm54, %v186, 0.0
    %189 = vadd.xlane.f32.xlu0 %v188
    %v190 = vpop.xlane.xlu0 %189
    %v191 = vsel %vm54, %v187, 0.0
    %192 = vadd.xlane.f32.xlu0 %v191
    %v193 = vpop.xlane.xlu0 %192
    %v194 = vrcp.pop 32.0
    %v195 = vmul.f32 %v190, %v194
    %v196 = vmul.f32 %v193, %v194
    %v197 = vsub.f32 %v186, %v195
    %v198 = vsub.f32 %v187, %v196
    %v199 = vmul.f32 %v197, %v197
    %v200 = vmul.f32 %v198, %v198
    %v201 = vsel %vm54, %v199, 0.0
    %202 = vadd.xlane.f32.xlu0 %v201
    %v203 = vpop.xlane.xlu0 %202
    %v204 = vsel %vm54, %v200, 0.0
    %205 = vadd.xlane.f32.xlu0 %v204
    %v206 = vpop.xlane.xlu0 %205
    %v207 = vmul.f32 %v203, %v194
    %v208 = vmul.f32 %v206, %v194
    %v209 = vadd.f32 %v207, 1e-05
    %v210 = vadd.f32 %v208, 1e-05
    %v211 = vrsqrt.pop %v209
    %v212 = vrsqrt.pop %v210
    %v213 = vmul.f32 %v197, %v211
    %v214 = vmul.f32 %v198, %v212
    %v215 = vld [vmem:[%s5] sm:$0x1]
    %v217 = vlaneseq
    %v218 = vshrl.u32 %v217, 7
    %v219 = vsub.s32 0, %v218
    %v220 = vrot.slane %v215, %v219
    %v222 = vmul.f32 %v213, %v220
    %v223 = vmul.f32 %v214, %v220
    %v224 = vld [vmem:[%s6] sm:$0x1]
    %v226 = vlaneseq
    %v227 = vshrl.u32 %v226, 7
    %v228 = vsub.s32 0, %v227
    %v229 = vrot.slane %v224, %v228
    %v231 = vadd.f32 %v222, %v229
    %v232 = vadd.f32 %v223, %v229
    %233 = vst.msk [vmem:[#allocation2] sm:$0xff] %vm54, %v231
    %234 = vst.msk [vmem:[#allocation2 + $0x8] sm:$0xff] %vm54, %v232
    // Predicated region
    $region30: #{bert_forward.15} parent=1 // pred_check
      _
    $region31: #{bert_forward.15} parent=1 // pred_check_branch
      %236 = sbr.rel (0) target = $region33
    $region32: #{bert_forward.15} parent=1 // pred_region
      %s238 = ssub.s32 256, 256
      %239 = vsyncadd [#allocation3], %s238
      %s240 = sshll.u32 [#allocation2], 4
      %s241 = int_to_ptr.vmem [resolvable:$true] %s240
      %246 = dma.vmem_to_hbm [thread:$0]  %s241, 256, %s7, [#allocation3], 128, 128, 8
    $region33: #{bert_forward.15} parent=1 // pred_fallthru
      _
    // Predicated region
    $region34: #{bert_forward.15} parent=1 // pred_check
      _
    $region35: #{bert_forward.15} parent=1 // pred_check_branch
      %248 = sbr.rel (0) target = $region37
    $region36: #{bert_forward.15} parent=1 // pred_region
      %249 = dma.done [#allocation3], 256
    $region37: #{bert_forward.15} parent=1 // pred_fallthru
      _
    %250 = vsyncpa [#allocation3], 1

</llo_original>
